<compile_context>
chip_gen: v5e
topology: v5e:2x2
jax: 0.10.0
libtpu: 0.0.40
codegen_flags: <defaults>
</compile_context>

<pallas_src>
import jax
import jax.numpy as jnp
from jax import lax
from jax.experimental import pallas as pl
from jax.experimental.pallas import tpu as pltpu

_TILE_B = 128          # batch lanes per grid step (keep ==128: lane-dense, v7x-safe)
_N_SPATIAL = 400       # 20*20 final output locations
_N_CHUNKS = _N_SPATIAL // 8   # 50 register-resident (8, TB) chunks


# ------------------------------ Fused kernel --------------------------------

def _policy_fused_kernel(c1w_ref, c1b_ref, c2w_ref, c2b_ref, beff_ref,
                         xp_ref, weff_ref, out_ref):
    tb = out_ref.shape[-1]

    # Hoist the tiny conv weights/biases (SMEM scalars) out of the chunk loop.
    c1w = [c1w_ref[k] for k in range(32)]    # [c1,ci,di,dj] flat
    c1b = [c1b_ref[k] for k in range(4)]
    c2w = [c2w_ref[k] for k in range(128)]   # [c2,c1,a1,b1] flat
    c2b = [c2b_ref[k] for k in range(8)]

    def chunk_body(c, zacc):
        # One (8, tb) chunk: 8 spatial locations (sublanes) x tb frames (lanes).
        base = pl.multiple_of(c * 8, 8)

        acc2 = [None] * 8                     # conv2 pre-activations (1 vreg each)
        for a1 in range(2):                   # conv1-output position inside the
            for b1 in range(2):               # 2x2 conv2 receptive field
                xs = {}                       # 8 input components for this position
                for ci in range(2):
                    for di in range(2):
                        for dj in range(2):
                            q = ci * 16 + (2 * a1 + di) * 4 + (2 * b1 + dj)
                            xs[(ci, di, dj)] = xp_ref[q, pl.ds(base, 8), :]
                for c1 in range(4):
                    acc = None
                    for ci in range(2):
                        for di in range(2):
                            for dj in range(2):
                                w = c1w[((c1 * 2 + ci) * 2 + di) * 2 + dj]
                                t = xs[(ci, di, dj)] * w
                                acc = t if acc is None else acc + t
                    h1 = jnp.maximum(acc + c1b[c1], 0.0)          # conv1 + ReLU
                    for c2 in range(8):
                        w = c2w[((c2 * 4 + c1) * 2 + a1) * 2 + b1]
                        t = h1 * w
                        acc2[c2] = t if acc2[c2] is None else acc2[c2] + t

        # conv2 ReLU + folded fc1∘fc2: weight the (8, tb) slab by the matching
        # (8, tb) slice of w_eff (pre-broadcast across lanes) and accumulate.
        for c2 in range(8):
            y2 = jnp.maximum(acc2[c2] + c2b[c2], 0.0)
            zacc = zacc + y2 * weff_ref[c2, pl.ds(base, 8), :]
        return zacc

    zacc = lax.fori_loop(0, _N_CHUNKS, chunk_body,
                         jnp.zeros((8, tb), jnp.float32))

    # Final sublane reduce (XLU), bias, sigmoid; lane-dense (1, tb) store.
    z = jnp.sum(zacc, axis=0, keepdims=True) + beff_ref[0]
    out_ref[...] = (1.0 / (1.0 + jnp.exp(-z))).astype(out_ref.dtype)


# ------------------------------ Forward wrapper ------------------------------

def policy_forward(params, x):
    """x: (N, 2, 80, 80) NCHW float32 -> (N, 1) sigmoid probabilities."""
    N = x.shape[0]
    x = x.astype(jnp.float32)

    tb = _TILE_B
    n_tiles = max(1, -(-N // tb))
    n_pad = n_tiles * tb
    if n_pad != N:
        x = jnp.pad(x, ((0, n_pad - N), (0, 0), (0, 0), (0, 0)))

    # Single relayout pass: (Np,2,80,80) -> (tiles, 32, 400, tb).
    #   axis1 (32): q = ci*16 + a*4 + b   (position inside each 4x4 input patch)
    #   axis2 (400): s = i2*20 + j2       (final output location)
    #   axis3 (tb): batch on LANES; each grid step reads one contiguous block.
    xp = (x.reshape(n_tiles, tb, 2, 20, 4, 20, 4)
            .transpose(0, 2, 4, 6, 3, 5, 1)
            .reshape(n_tiles, 32, _N_SPATIAL, tb))

    f32 = jnp.float32
    c1w = params["conv1_w"].reshape(-1).astype(f32)    # (32,)  [c1,ci,di,dj]
    c1b = params["conv1_b"].astype(f32)                # (4,)
    c2w = params["conv2_w"].reshape(-1).astype(f32)    # (128,) [c2,c1,a1,b1]
    c2b = params["conv2_b"].astype(f32)                # (8,)

    # Fold fc2∘fc1 (no nonlinearity between them in the module). High precision
    # for the fold so the 1e-5 check against the unfolded reference holds.
    hp = lax.Precision.HIGHEST
    fc1w = params["fc1_w"].astype(f32)                 # (64, 3200), NCHW flatten
    fc1b = params["fc1_b"].astype(f32)                 # (64,)
    fc2w = params["fc2_w"].astype(f32)                 # (1, 64)
    fc2b = params["fc2_b"].astype(f32)                 # (1,)
    w_eff = jnp.dot(fc2w, fc1w, precision=hp)          # (1, 3200)
    b_eff = jnp.dot(fc2w, fc1b, precision=hp) + fc2b   # (1,)
    # (8, 400) channel-major weights, pre-broadcast across the tb batch lanes.
    weff = jnp.broadcast_to(w_eff.reshape(8, _N_SPATIAL, 1), (8, _N_SPATIAL, tb))

    per_frame_flops = 2 * (51200 + 51200 + 3200)   # conv1 + conv2 + folded fc
    flops = n_pad * per_frame_flops
    bytes_accessed = 4 * (xp.size + weff.size + c1w.size + c1b.size + c2w.size
                          + c2b.size + b_eff.size + n_pad)

    smem = pltpu.MemorySpace.SMEM
    out = pl.pallas_call(
        _policy_fused_kernel,
        out_shape=jax.ShapeDtypeStruct((1, n_pad), jnp.float32),
        grid=(n_tiles,),
        in_specs=[
            pl.BlockSpec(memory_space=smem),                            # conv1_w
            pl.BlockSpec(memory_space=smem),                            # conv1_b
            pl.BlockSpec(memory_space=smem),                            # conv2_w
            pl.BlockSpec(memory_space=smem),                            # conv2_b
            pl.BlockSpec(memory_space=smem),                            # b_eff
            pl.BlockSpec((None, 32, _N_SPATIAL, tb),
                         lambda i: (i, 0, 0, 0)),                       # input patches
            pl.BlockSpec((8, _N_SPATIAL, tb), lambda i: (0, 0, 0)),     # folded fc w
        ],
        out_specs=pl.BlockSpec((1, tb), lambda i: (0, i)),              # lane-dense
        compiler_params=pltpu.CompilerParams(
            dimension_semantics=("parallel",),
            vmem_limit_bytes=32 * 1024 * 1024),
        cost_estimate=pl.CostEstimate(
            flops=flops, transcendentals=n_pad, bytes_accessed=bytes_accessed),
    )(c1w, c1b, c2w, c2b, b_eff, xp, weff)

    return out[0, :N][:, None]


# ------------------------------ Parameter init -------------------------------

def init_params(key):
    """Deterministic init mimicking PyTorch default U(-1/sqrt(fan_in), 1/sqrt(fan_in))."""
    ks = jax.random.split(key, 8)

    def u(k, shape, fan_in):
        bound = 1.0 / jnp.sqrt(fan_in)
        return jax.random.uniform(k, shape, jnp.float32, -bound, bound)

    return {
        "conv1_w": u(ks[0], (4, 2, 2, 2), 2 * 2 * 2),    # OIHW
        "conv1_b": u(ks[1], (4,), 2 * 2 * 2),
        "conv2_w": u(ks[2], (8, 4, 2, 2), 4 * 2 * 2),    # OIHW
        "conv2_b": u(ks[3], (8,), 4 * 2 * 2),
        "fc1_w":   u(ks[4], (64, 3200), 3200),           # torch (out, in)
        "fc1_b":   u(ks[5], (64,), 3200),
        "fc2_w":   u(ks[6], (1, 64), 64),                # torch (out, in)
        "fc2_b":   u(ks[7], (1,), 64),
    }


# ----------------------------- Pure-JAX reference ----------------------------

def policy_forward_ref(params, x):
    hp = lax.Precision.HIGHEST
    y = lax.conv_general_dilated(
        x, params["conv1_w"], window_strides=(2, 2), padding="VALID",
        dimension_numbers=("NCHW", "OIHW", "NCHW"), precision=hp)
    y = jnp.maximum(y + params["conv1_b"][None, :, None, None], 0.0)
    y = lax.conv_general_dilated(
        y, params["conv2_w"], window_strides=(2, 2), padding="VALID",
        dimension_numbers=("NCHW", "OIHW", "NCHW"), precision=hp)
    y = jnp.maximum(y + params["conv2_b"][None, :, None, None], 0.0)
    flat = y.reshape(y.shape[0], -1)
    h = jnp.dot(flat, params["fc1_w"].T, precision=hp) + params["fc1_b"]
    z = jnp.dot(h, params["fc2_w"].T, precision=hp) + params["fc2_b"]
    return jax.nn.sigmoid(z)


# --------------------------------- Main ---------------------------------------

if __name__ == "__main__":
    key = jax.random.PRNGKey(0)
    k_param, k_x = jax.random.split(key)

    params = init_params(k_param)
    fwd = jax.jit(policy_forward)

    # Smoke test at the module's implied input shape (80x80, 2 channels), batch=2.
    x_small = jax.random.normal(k_x, (2, 2, 80, 80), dtype=jnp.float32)
    out_small = jax.block_until_ready(fwd(params, x_small))
    ref_small = jax.block_until_ready(policy_forward_ref(params, x_small))
    assert out_small.shape == (2, 1), out_small.shape
    assert jnp.allclose(out_small, ref_small, atol=1e-5, rtol=1e-5), (out_small, ref_small)

    # Multi-tile grid path (padded batch, 2 grid steps).
    x_big = jax.random.normal(jax.random.PRNGKey(1), (192, 2, 80, 80), dtype=jnp.float32)
    out_big = jax.block_until_ready(fwd(params, x_big))
    ref_big = jax.block_until_ready(policy_forward_ref(params, x_big))
    assert out_big.shape == (192, 1), out_big.shape
    assert jnp.allclose(out_big, ref_big, atol=1e-5, rtol=1e-5)

    print("KERNEL_OK")
</pallas_src>

<mosaic_0001>
module attributes {stable_mosaic.version = 11 : i64} {
  func.func @_policy_fused_kernel(%arg0: i32, %arg1: memref<32xf32, #tpu.memory_space<smem>>, %arg2: memref<4xf32, #tpu.memory_space<smem>>, %arg3: memref<128xf32, #tpu.memory_space<smem>>, %arg4: memref<8xf32, #tpu.memory_space<smem>>, %arg5: memref<1xf32, #tpu.memory_space<smem>>, %arg6: memref<1x32x400x128xf32, #tpu.memory_space<vmem>>, %arg7: memref<8x400x128xf32, #tpu.memory_space<vmem>>, %arg8: memref<1x128xf32, #tpu.memory_space<vmem>>) attributes {dimension_semantics = [#tpu.dimension_semantics<parallel>], iteration_bounds = array<i64: 1>, scalar_prefetch = 0 : i64, scratch_operands = 0 : i64, tpu.core_type = #tpu.core_type<tc>, window_params = [{transform_indices = @transform_0, window_bounds = array<i64: 32>}, {transform_indices = @transform_1, window_bounds = array<i64: 4>}, {transform_indices = @transform_2, window_bounds = array<i64: 128>}, {transform_indices = @transform_3, window_bounds = array<i64: 8>}, {transform_indices = @transform_4, window_bounds = array<i64: 1>}, {transform_indices = @transform_5, window_bounds = array<i64: 1, 32, 400, 128>}, {pipeline_mode = #tpu.pipeline_mode<synchronous>, transform_indices = @transform_6, window_bounds = array<i64: 8, 400, 128>}, {transform_indices = @transform_7, window_bounds = array<i64: 1, 128>}]} {
    %c0 = arith.constant 0 : index
    %0 = memref.load %arg1[%c0] : memref<32xf32, #tpu.memory_space<smem>>
    %c1 = arith.constant 1 : index
    %1 = memref.load %arg1[%c1] : memref<32xf32, #tpu.memory_space<smem>>
    %c2 = arith.constant 2 : index
    %2 = memref.load %arg1[%c2] : memref<32xf32, #tpu.memory_space<smem>>
    %c3 = arith.constant 3 : index
    %3 = memref.load %arg1[%c3] : memref<32xf32, #tpu.memory_space<smem>>
    %c4 = arith.constant 4 : index
    %4 = memref.load %arg1[%c4] : memref<32xf32, #tpu.memory_space<smem>>
    %c5 = arith.constant 5 : index
    %5 = memref.load %arg1[%c5] : memref<32xf32, #tpu.memory_space<smem>>
    %c6 = arith.constant 6 : index
    %6 = memref.load %arg1[%c6] : memref<32xf32, #tpu.memory_space<smem>>
    %c7 = arith.constant 7 : index
    %7 = memref.load %arg1[%c7] : memref<32xf32, #tpu.memory_space<smem>>
    %c8 = arith.constant 8 : index
    %8 = memref.load %arg1[%c8] : memref<32xf32, #tpu.memory_space<smem>>
    %c9 = arith.constant 9 : index
    %9 = memref.load %arg1[%c9] : memref<32xf32, #tpu.memory_space<smem>>
    %c10 = arith.constant 10 : index
    %10 = memref.load %arg1[%c10] : memref<32xf32, #tpu.memory_space<smem>>
    %c11 = arith.constant 11 : index
    %11 = memref.load %arg1[%c11] : memref<32xf32, #tpu.memory_space<smem>>
    %c12 = arith.constant 12 : index
    %12 = memref.load %arg1[%c12] : memref<32xf32, #tpu.memory_space<smem>>
    %c13 = arith.constant 13 : index
    %13 = memref.load %arg1[%c13] : memref<32xf32, #tpu.memory_space<smem>>
    %c14 = arith.constant 14 : index
    %14 = memref.load %arg1[%c14] : memref<32xf32, #tpu.memory_space<smem>>
    %c15 = arith.constant 15 : index
    %15 = memref.load %arg1[%c15] : memref<32xf32, #tpu.memory_space<smem>>
    %c16 = arith.constant 16 : index
    %16 = memref.load %arg1[%c16] : memref<32xf32, #tpu.memory_space<smem>>
    %c17 = arith.constant 17 : index
    %17 = memref.load %arg1[%c17] : memref<32xf32, #tpu.memory_space<smem>>
    %c18 = arith.constant 18 : index
    %18 = memref.load %arg1[%c18] : memref<32xf32, #tpu.memory_space<smem>>
    %c19 = arith.constant 19 : index
    %19 = memref.load %arg1[%c19] : memref<32xf32, #tpu.memory_space<smem>>
    %c20 = arith.constant 20 : index
    %20 = memref.load %arg1[%c20] : memref<32xf32, #tpu.memory_space<smem>>
    %c21 = arith.constant 21 : index
    %21 = memref.load %arg1[%c21] : memref<32xf32, #tpu.memory_space<smem>>
    %c22 = arith.constant 22 : index
    %22 = memref.load %arg1[%c22] : memref<32xf32, #tpu.memory_space<smem>>
    %c23 = arith.constant 23 : index
    %23 = memref.load %arg1[%c23] : memref<32xf32, #tpu.memory_space<smem>>
    %c24 = arith.constant 24 : index
    %24 = memref.load %arg1[%c24] : memref<32xf32, #tpu.memory_space<smem>>
    %c25 = arith.constant 25 : index
    %25 = memref.load %arg1[%c25] : memref<32xf32, #tpu.memory_space<smem>>
    %c26 = arith.constant 26 : index
    %26 = memref.load %arg1[%c26] : memref<32xf32, #tpu.memory_space<smem>>
    %c27 = arith.constant 27 : index
    %27 = memref.load %arg1[%c27] : memref<32xf32, #tpu.memory_space<smem>>
    %c28 = arith.constant 28 : index
    %28 = memref.load %arg1[%c28] : memref<32xf32, #tpu.memory_space<smem>>
    %c29 = arith.constant 29 : index
    %29 = memref.load %arg1[%c29] : memref<32xf32, #tpu.memory_space<smem>>
    %c30 = arith.constant 30 : index
    %30 = memref.load %arg1[%c30] : memref<32xf32, #tpu.memory_space<smem>>
    %c31 = arith.constant 31 : index
    %31 = memref.load %arg1[%c31] : memref<32xf32, #tpu.memory_space<smem>>
    %c0_0 = arith.constant 0 : index
    %32 = memref.load %arg2[%c0_0] : memref<4xf32, #tpu.memory_space<smem>>
    %c1_1 = arith.constant 1 : index
    %33 = memref.load %arg2[%c1_1] : memref<4xf32, #tpu.memory_space<smem>>
    %c2_2 = arith.constant 2 : index
    %34 = memref.load %arg2[%c2_2] : memref<4xf32, #tpu.memory_space<smem>>
    %c3_3 = arith.constant 3 : index
    %35 = memref.load %arg2[%c3_3] : memref<4xf32, #tpu.memory_space<smem>>
    %c0_4 = arith.constant 0 : index
    %36 = memref.load %arg3[%c0_4] : memref<128xf32, #tpu.memory_space<smem>>
    %c1_5 = arith.constant 1 : index
    %37 = memref.load %arg3[%c1_5] : memref<128xf32, #tpu.memory_space<smem>>
    %c2_6 = arith.constant 2 : index
    %38 = memref.load %arg3[%c2_6] : memref<128xf32, #tpu.memory_space<smem>>
    %c3_7 = arith.constant 3 : index
    %39 = memref.load %arg3[%c3_7] : memref<128xf32, #tpu.memory_space<smem>>
    %c4_8 = arith.constant 4 : index
    %40 = memref.load %arg3[%c4_8] : memref<128xf32, #tpu.memory_space<smem>>
    %c5_9 = arith.constant 5 : index
    %41 = memref.load %arg3[%c5_9] : memref<128xf32, #tpu.memory_space<smem>>
    %c6_10 = arith.constant 6 : index
    %42 = memref.load %arg3[%c6_10] : memref<128xf32, #tpu.memory_space<smem>>
    %c7_11 = arith.constant 7 : index
    %43 = memref.load %arg3[%c7_11] : memref<128xf32, #tpu.memory_space<smem>>
    %c8_12 = arith.constant 8 : index
    %44 = memref.load %arg3[%c8_12] : memref<128xf32, #tpu.memory_space<smem>>
    %c9_13 = arith.constant 9 : index
    %45 = memref.load %arg3[%c9_13] : memref<128xf32, #tpu.memory_space<smem>>
    %c10_14 = arith.constant 10 : index
    %46 = memref.load %arg3[%c10_14] : memref<128xf32, #tpu.memory_space<smem>>
    %c11_15 = arith.constant 11 : index
    %47 = memref.load %arg3[%c11_15] : memref<128xf32, #tpu.memory_space<smem>>
    %c12_16 = arith.constant 12 : index
    %48 = memref.load %arg3[%c12_16] : memref<128xf32, #tpu.memory_space<smem>>
    %c13_17 = arith.constant 13 : index
    %49 = memref.load %arg3[%c13_17] : memref<128xf32, #tpu.memory_space<smem>>
    %c14_18 = arith.constant 14 : index
    %50 = memref.load %arg3[%c14_18] : memref<128xf32, #tpu.memory_space<smem>>
    %c15_19 = arith.constant 15 : index
    %51 = memref.load %arg3[%c15_19] : memref<128xf32, #tpu.memory_space<smem>>
    %c16_20 = arith.constant 16 : index
    %52 = memref.load %arg3[%c16_20] : memref<128xf32, #tpu.memory_space<smem>>
    %c17_21 = arith.constant 17 : index
    %53 = memref.load %arg3[%c17_21] : memref<128xf32, #tpu.memory_space<smem>>
    %c18_22 = arith.constant 18 : index
    %54 = memref.load %arg3[%c18_22] : memref<128xf32, #tpu.memory_space<smem>>
    %c19_23 = arith.constant 19 : index
    %55 = memref.load %arg3[%c19_23] : memref<128xf32, #tpu.memory_space<smem>>
    %c20_24 = arith.constant 20 : index
    %56 = memref.load %arg3[%c20_24] : memref<128xf32, #tpu.memory_space<smem>>
    %c21_25 = arith.constant 21 : index
    %57 = memref.load %arg3[%c21_25] : memref<128xf32, #tpu.memory_space<smem>>
    %c22_26 = arith.constant 22 : index
    %58 = memref.load %arg3[%c22_26] : memref<128xf32, #tpu.memory_space<smem>>
    %c23_27 = arith.constant 23 : index
    %59 = memref.load %arg3[%c23_27] : memref<128xf32, #tpu.memory_space<smem>>
    %c24_28 = arith.constant 24 : index
    %60 = memref.load %arg3[%c24_28] : memref<128xf32, #tpu.memory_space<smem>>
    %c25_29 = arith.constant 25 : index
    %61 = memref.load %arg3[%c25_29] : memref<128xf32, #tpu.memory_space<smem>>
    %c26_30 = arith.constant 26 : index
    %62 = memref.load %arg3[%c26_30] : memref<128xf32, #tpu.memory_space<smem>>
    %c27_31 = arith.constant 27 : index
    %63 = memref.load %arg3[%c27_31] : memref<128xf32, #tpu.memory_space<smem>>
    %c28_32 = arith.constant 28 : index
    %64 = memref.load %arg3[%c28_32] : memref<128xf32, #tpu.memory_space<smem>>
    %c29_33 = arith.constant 29 : index
    %65 = memref.load %arg3[%c29_33] : memref<128xf32, #tpu.memory_space<smem>>
    %c30_34 = arith.constant 30 : index
    %66 = memref.load %arg3[%c30_34] : memref<128xf32, #tpu.memory_space<smem>>
    %c31_35 = arith.constant 31 : index
    %67 = memref.load %arg3[%c31_35] : memref<128xf32, #tpu.memory_space<smem>>
    %c32 = arith.constant 32 : index
    %68 = memref.load %arg3[%c32] : memref<128xf32, #tpu.memory_space<smem>>
    %c33 = arith.constant 33 : index
    %69 = memref.load %arg3[%c33] : memref<128xf32, #tpu.memory_space<smem>>
    %c34 = arith.constant 34 : index
    %70 = memref.load %arg3[%c34] : memref<128xf32, #tpu.memory_space<smem>>
    %c35 = arith.constant 35 : index
    %71 = memref.load %arg3[%c35] : memref<128xf32, #tpu.memory_space<smem>>
    %c36 = arith.constant 36 : index
    %72 = memref.load %arg3[%c36] : memref<128xf32, #tpu.memory_space<smem>>
    %c37 = arith.constant 37 : index
    %73 = memref.load %arg3[%c37] : memref<128xf32, #tpu.memory_space<smem>>
    %c38 = arith.constant 38 : index
    %74 = memref.load %arg3[%c38] : memref<128xf32, #tpu.memory_space<smem>>
    %c39 = arith.constant 39 : index
    %75 = memref.load %arg3[%c39] : memref<128xf32, #tpu.memory_space<smem>>
    %c40 = arith.constant 40 : index
    %76 = memref.load %arg3[%c40] : memref<128xf32, #tpu.memory_space<smem>>
    %c41 = arith.constant 41 : index
    %77 = memref.load %arg3[%c41] : memref<128xf32, #tpu.memory_space<smem>>
    %c42 = arith.constant 42 : index
    %78 = memref.load %arg3[%c42] : memref<128xf32, #tpu.memory_space<smem>>
    %c43 = arith.constant 43 : index
    %79 = memref.load %arg3[%c43] : memref<128xf32, #tpu.memory_space<smem>>
    %c44 = arith.constant 44 : index
    %80 = memref.load %arg3[%c44] : memref<128xf32, #tpu.memory_space<smem>>
    %c45 = arith.constant 45 : index
    %81 = memref.load %arg3[%c45] : memref<128xf32, #tpu.memory_space<smem>>
    %c46 = arith.constant 46 : index
    %82 = memref.load %arg3[%c46] : memref<128xf32, #tpu.memory_space<smem>>
    %c47 = arith.constant 47 : index
    %83 = memref.load %arg3[%c47] : memref<128xf32, #tpu.memory_space<smem>>
    %c48 = arith.constant 48 : index
    %84 = memref.load %arg3[%c48] : memref<128xf32, #tpu.memory_space<smem>>
    %c49 = arith.constant 49 : index
    %85 = memref.load %arg3[%c49] : memref<128xf32, #tpu.memory_space<smem>>
    %c50 = arith.constant 50 : index
    %86 = memref.load %arg3[%c50] : memref<128xf32, #tpu.memory_space<smem>>
    %c51 = arith.constant 51 : index
    %87 = memref.load %arg3[%c51] : memref<128xf32, #tpu.memory_space<smem>>
    %c52 = arith.constant 52 : index
    %88 = memref.load %arg3[%c52] : memref<128xf32, #tpu.memory_space<smem>>
    %c53 = arith.constant 53 : index
    %89 = memref.load %arg3[%c53] : memref<128xf32, #tpu.memory_space<smem>>
    %c54 = arith.constant 54 : index
    %90 = memref.load %arg3[%c54] : memref<128xf32, #tpu.memory_space<smem>>
    %c55 = arith.constant 55 : index
    %91 = memref.load %arg3[%c55] : memref<128xf32, #tpu.memory_space<smem>>
    %c56 = arith.constant 56 : index
    %92 = memref.load %arg3[%c56] : memref<128xf32, #tpu.memory_space<smem>>
    %c57 = arith.constant 57 : index
    %93 = memref.load %arg3[%c57] : memref<128xf32, #tpu.memory_space<smem>>
    %c58 = arith.constant 58 : index
    %94 = memref.load %arg3[%c58] : memref<128xf32, #tpu.memory_space<smem>>
    %c59 = arith.constant 59 : index
    %95 = memref.load %arg3[%c59] : memref<128xf32, #tpu.memory_space<smem>>
    %c60 = arith.constant 60 : index
    %96 = memref.load %arg3[%c60] : memref<128xf32, #tpu.memory_space<smem>>
    %c61 = arith.constant 61 : index
    %97 = memref.load %arg3[%c61] : memref<128xf32, #tpu.memory_space<smem>>
    %c62 = arith.constant 62 : index
    %98 = memref.load %arg3[%c62] : memref<128xf32, #tpu.memory_space<smem>>
    %c63 = arith.constant 63 : index
    %99 = memref.load %arg3[%c63] : memref<128xf32, #tpu.memory_space<smem>>
    %c64 = arith.constant 64 : index
    %100 = memref.load %arg3[%c64] : memref<128xf32, #tpu.memory_space<smem>>
    %c65 = arith.constant 65 : index
    %101 = memref.load %arg3[%c65] : memref<128xf32, #tpu.memory_space<smem>>
    %c66 = arith.constant 66 : index
    %102 = memref.load %arg3[%c66] : memref<128xf32, #tpu.memory_space<smem>>
    %c67 = arith.constant 67 : index
    %103 = memref.load %arg3[%c67] : memref<128xf32, #tpu.memory_space<smem>>
    %c68 = arith.constant 68 : index
    %104 = memref.load %arg3[%c68] : memref<128xf32, #tpu.memory_space<smem>>
    %c69 = arith.constant 69 : index
    %105 = memref.load %arg3[%c69] : memref<128xf32, #tpu.memory_space<smem>>
    %c70 = arith.constant 70 : index
    %106 = memref.load %arg3[%c70] : memref<128xf32, #tpu.memory_space<smem>>
    %c71 = arith.constant 71 : index
    %107 = memref.load %arg3[%c71] : memref<128xf32, #tpu.memory_space<smem>>
    %c72 = arith.constant 72 : index
    %108 = memref.load %arg3[%c72] : memref<128xf32, #tpu.memory_space<smem>>
    %c73 = arith.constant 73 : index
    %109 = memref.load %arg3[%c73] : memref<128xf32, #tpu.memory_space<smem>>
    %c74 = arith.constant 74 : index
    %110 = memref.load %arg3[%c74] : memref<128xf32, #tpu.memory_space<smem>>
    %c75 = arith.constant 75 : index
    %111 = memref.load %arg3[%c75] : memref<128xf32, #tpu.memory_space<smem>>
    %c76 = arith.constant 76 : index
    %112 = memref.load %arg3[%c76] : memref<128xf32, #tpu.memory_space<smem>>
    %c77 = arith.constant 77 : index
    %113 = memref.load %arg3[%c77] : memref<128xf32, #tpu.memory_space<smem>>
    %c78 = arith.constant 78 : index
    %114 = memref.load %arg3[%c78] : memref<128xf32, #tpu.memory_space<smem>>
    %c79 = arith.constant 79 : index
    %115 = memref.load %arg3[%c79] : memref<128xf32, #tpu.memory_space<smem>>
    %c80 = arith.constant 80 : index
    %116 = memref.load %arg3[%c80] : memref<128xf32, #tpu.memory_space<smem>>
    %c81 = arith.constant 81 : index
    %117 = memref.load %arg3[%c81] : memref<128xf32, #tpu.memory_space<smem>>
    %c82 = arith.constant 82 : index
    %118 = memref.load %arg3[%c82] : memref<128xf32, #tpu.memory_space<smem>>
    %c83 = arith.constant 83 : index
    %119 = memref.load %arg3[%c83] : memref<128xf32, #tpu.memory_space<smem>>
    %c84 = arith.constant 84 : index
    %120 = memref.load %arg3[%c84] : memref<128xf32, #tpu.memory_space<smem>>
    %c85 = arith.constant 85 : index
    %121 = memref.load %arg3[%c85] : memref<128xf32, #tpu.memory_space<smem>>
    %c86 = arith.constant 86 : index
    %122 = memref.load %arg3[%c86] : memref<128xf32, #tpu.memory_space<smem>>
    %c87 = arith.constant 87 : index
    %123 = memref.load %arg3[%c87] : memref<128xf32, #tpu.memory_space<smem>>
    %c88 = arith.constant 88 : index
    %124 = memref.load %arg3[%c88] : memref<128xf32, #tpu.memory_space<smem>>
    %c89 = arith.constant 89 : index
    %125 = memref.load %arg3[%c89] : memref<128xf32, #tpu.memory_space<smem>>
    %c90 = arith.constant 90 : index
    %126 = memref.load %arg3[%c90] : memref<128xf32, #tpu.memory_space<smem>>
    %c91 = arith.constant 91 : index
    %127 = memref.load %arg3[%c91] : memref<128xf32, #tpu.memory_space<smem>>
    %c92 = arith.constant 92 : index
    %128 = memref.load %arg3[%c92] : memref<128xf32, #tpu.memory_space<smem>>
    %c93 = arith.constant 93 : index
    %129 = memref.load %arg3[%c93] : memref<128xf32, #tpu.memory_space<smem>>
    %c94 = arith.constant 94 : index
    %130 = memref.load %arg3[%c94] : memref<128xf32, #tpu.memory_space<smem>>
    %c95 = arith.constant 95 : index
    %131 = memref.load %arg3[%c95] : memref<128xf32, #tpu.memory_space<smem>>
    %c96 = arith.constant 96 : index
    %132 = memref.load %arg3[%c96] : memref<128xf32, #tpu.memory_space<smem>>
    %c97 = arith.constant 97 : index
    %133 = memref.load %arg3[%c97] : memref<128xf32, #tpu.memory_space<smem>>
    %c98 = arith.constant 98 : index
    %134 = memref.load %arg3[%c98] : memref<128xf32, #tpu.memory_space<smem>>
    %c99 = arith.constant 99 : index
    %135 = memref.load %arg3[%c99] : memref<128xf32, #tpu.memory_space<smem>>
    %c100 = arith.constant 100 : index
    %136 = memref.load %arg3[%c100] : memref<128xf32, #tpu.memory_space<smem>>
    %c101 = arith.constant 101 : index
    %137 = memref.load %arg3[%c101] : memref<128xf32, #tpu.memory_space<smem>>
    %c102 = arith.constant 102 : index
    %138 = memref.load %arg3[%c102] : memref<128xf32, #tpu.memory_space<smem>>
    %c103 = arith.constant 103 : index
    %139 = memref.load %arg3[%c103] : memref<128xf32, #tpu.memory_space<smem>>
    %c104 = arith.constant 104 : index
    %140 = memref.load %arg3[%c104] : memref<128xf32, #tpu.memory_space<smem>>
    %c105 = arith.constant 105 : index
    %141 = memref.load %arg3[%c105] : memref<128xf32, #tpu.memory_space<smem>>
    %c106 = arith.constant 106 : index
    %142 = memref.load %arg3[%c106] : memref<128xf32, #tpu.memory_space<smem>>
    %c107 = arith.constant 107 : index
    %143 = memref.load %arg3[%c107] : memref<128xf32, #tpu.memory_space<smem>>
    %c108 = arith.constant 108 : index
    %144 = memref.load %arg3[%c108] : memref<128xf32, #tpu.memory_space<smem>>
    %c109 = arith.constant 109 : index
    %145 = memref.load %arg3[%c109] : memref<128xf32, #tpu.memory_space<smem>>
    %c110 = arith.constant 110 : index
    %146 = memref.load %arg3[%c110] : memref<128xf32, #tpu.memory_space<smem>>
    %c111 = arith.constant 111 : index
    %147 = memref.load %arg3[%c111] : memref<128xf32, #tpu.memory_space<smem>>
    %c112 = arith.constant 112 : index
    %148 = memref.load %arg3[%c112] : memref<128xf32, #tpu.memory_space<smem>>
    %c113 = arith.constant 113 : index
    %149 = memref.load %arg3[%c113] : memref<128xf32, #tpu.memory_space<smem>>
    %c114 = arith.constant 114 : index
    %150 = memref.load %arg3[%c114] : memref<128xf32, #tpu.memory_space<smem>>
    %c115 = arith.constant 115 : index
    %151 = memref.load %arg3[%c115] : memref<128xf32, #tpu.memory_space<smem>>
    %c116 = arith.constant 116 : index
    %152 = memref.load %arg3[%c116] : memref<128xf32, #tpu.memory_space<smem>>
    %c117 = arith.constant 117 : index
    %153 = memref.load %arg3[%c117] : memref<128xf32, #tpu.memory_space<smem>>
    %c118 = arith.constant 118 : index
    %154 = memref.load %arg3[%c118] : memref<128xf32, #tpu.memory_space<smem>>
    %c119 = arith.constant 119 : index
    %155 = memref.load %arg3[%c119] : memref<128xf32, #tpu.memory_space<smem>>
    %c120 = arith.constant 120 : index
    %156 = memref.load %arg3[%c120] : memref<128xf32, #tpu.memory_space<smem>>
    %c121 = arith.constant 121 : index
    %157 = memref.load %arg3[%c121] : memref<128xf32, #tpu.memory_space<smem>>
    %c122 = arith.constant 122 : index
    %158 = memref.load %arg3[%c122] : memref<128xf32, #tpu.memory_space<smem>>
    %c123 = arith.constant 123 : index
    %159 = memref.load %arg3[%c123] : memref<128xf32, #tpu.memory_space<smem>>
    %c124 = arith.constant 124 : index
    %160 = memref.load %arg3[%c124] : memref<128xf32, #tpu.memory_space<smem>>
    %c125 = arith.constant 125 : index
    %161 = memref.load %arg3[%c125] : memref<128xf32, #tpu.memory_space<smem>>
    %c126 = arith.constant 126 : index
    %162 = memref.load %arg3[%c126] : memref<128xf32, #tpu.memory_space<smem>>
    %c127 = arith.constant 127 : index
    %163 = memref.load %arg3[%c127] : memref<128xf32, #tpu.memory_space<smem>>
    %c0_36 = arith.constant 0 : index
    %164 = memref.load %arg4[%c0_36] : memref<8xf32, #tpu.memory_space<smem>>
    %c1_37 = arith.constant 1 : index
    %165 = memref.load %arg4[%c1_37] : memref<8xf32, #tpu.memory_space<smem>>
    %c2_38 = arith.constant 2 : index
    %166 = memref.load %arg4[%c2_38] : memref<8xf32, #tpu.memory_space<smem>>
    %c3_39 = arith.constant 3 : index
    %167 = memref.load %arg4[%c3_39] : memref<8xf32, #tpu.memory_space<smem>>
    %c4_40 = arith.constant 4 : index
    %168 = memref.load %arg4[%c4_40] : memref<8xf32, #tpu.memory_space<smem>>
    %c5_41 = arith.constant 5 : index
    %169 = memref.load %arg4[%c5_41] : memref<8xf32, #tpu.memory_space<smem>>
    %c6_42 = arith.constant 6 : index
    %170 = memref.load %arg4[%c6_42] : memref<8xf32, #tpu.memory_space<smem>>
    %c7_43 = arith.constant 7 : index
    %171 = memref.load %arg4[%c7_43] : memref<8xf32, #tpu.memory_space<smem>>
    %cst = arith.constant 0.000000e+00 : f32
    %172 = vector.broadcast %cst : f32 to vector<8x128xf32>
    %c0_i32 = arith.constant 0 : i32
    %c50_i32 = arith.constant 50 : i32
    %173 = arith.addi %c0_i32, %c50_i32 : i32
    %c1_i32 = arith.constant 1 : i32
    %174 = scf.for %arg9 = %c0_i32 to %173 step %c1_i32 iter_args(%arg10 = %172) -> (vector<8x128xf32>)  : i32 {
      %c8_i32 = arith.constant 8 : i32
      %188 = arith.muli %arg9, %c8_i32 : i32
      %189 = tpu.assume_multiple %188, 8 : i32
      %c0_52 = arith.constant 0 : index
      %c0_53 = arith.constant 0 : index
      %190 = arith.index_cast %189 : i32 to index
      %c0_54 = arith.constant 0 : index
      %191 = vector.load %arg6[%c0_52, %c0_53, %190, %c0_54] : memref<1x32x400x128xf32, #tpu.memory_space<vmem>>, vector<1x1x8x128xf32>
      %192 = vector.shape_cast %191 : vector<1x1x8x128xf32> to vector<8x128xf32>
      %c0_55 = arith.constant 0 : index
      %c1_56 = arith.constant 1 : index
      %193 = arith.index_cast %189 : i32 to index
      %c0_57 = arith.constant 0 : index
      %194 = vector.load %arg6[%c0_55, %c1_56, %193, %c0_57] : memref<1x32x400x128xf32, #tpu.memory_space<vmem>>, vector<1x1x8x128xf32>
      %195 = vector.shape_cast %194 : vector<1x1x8x128xf32> to vector<8x128xf32>
      %c0_58 = arith.constant 0 : index
      %c4_59 = arith.constant 4 : index
      %196 = arith.index_cast %189 : i32 to index
      %c0_60 = arith.constant 0 : index
      %197 = vector.load %arg6[%c0_58, %c4_59, %196, %c0_60] : memref<1x32x400x128xf32, #tpu.memory_space<vmem>>, vector<1x1x8x128xf32>
      %198 = vector.shape_cast %197 : vector<1x1x8x128xf32> to vector<8x128xf32>
      %c0_61 = arith.constant 0 : index
      %c5_62 = arith.constant 5 : index
      %199 = arith.index_cast %189 : i32 to index
      %c0_63 = arith.constant 0 : index
      %200 = vector.load %arg6[%c0_61, %c5_62, %199, %c0_63] : memref<1x32x400x128xf32, #tpu.memory_space<vmem>>, vector<1x1x8x128xf32>
      %201 = vector.shape_cast %200 : vector<1x1x8x128xf32> to vector<8x128xf32>
      %c0_64 = arith.constant 0 : index
      %c16_65 = arith.constant 16 : index
      %202 = arith.index_cast %189 : i32 to index
      %c0_66 = arith.constant 0 : index
      %203 = vector.load %arg6[%c0_64, %c16_65, %202, %c0_66] : memref<1x32x400x128xf32, #tpu.memory_space<vmem>>, vector<1x1x8x128xf32>
      %204 = vector.shape_cast %203 : vector<1x1x8x128xf32> to vector<8x128xf32>
      %c0_67 = arith.constant 0 : index
      %c17_68 = arith.constant 17 : index
      %205 = arith.index_cast %189 : i32 to index
      %c0_69 = arith.constant 0 : index
      %206 = vector.load %arg6[%c0_67, %c17_68, %205, %c0_69] : memref<1x32x400x128xf32, #tpu.memory_space<vmem>>, vector<1x1x8x128xf32>
      %207 = vector.shape_cast %206 : vector<1x1x8x128xf32> to vector<8x128xf32>
      %c0_70 = arith.constant 0 : index
      %c20_71 = arith.constant 20 : index
      %208 = arith.index_cast %189 : i32 to index
      %c0_72 = arith.constant 0 : index
      %209 = vector.load %arg6[%c0_70, %c20_71, %208, %c0_72] : memref<1x32x400x128xf32, #tpu.memory_space<vmem>>, vector<1x1x8x128xf32>
      %210 = vector.shape_cast %209 : vector<1x1x8x128xf32> to vector<8x128xf32>
      %c0_73 = arith.constant 0 : index
      %c21_74 = arith.constant 21 : index
      %211 = arith.index_cast %189 : i32 to index
      %c0_75 = arith.constant 0 : index
      %212 = vector.load %arg6[%c0_73, %c21_74, %211, %c0_75] : memref<1x32x400x128xf32, #tpu.memory_space<vmem>>, vector<1x1x8x128xf32>
      %213 = vector.shape_cast %212 : vector<1x1x8x128xf32> to vector<8x128xf32>
      %214 = vector.broadcast %0 : f32 to vector<8x128xf32>
      %215 = arith.mulf %192, %214 : vector<8x128xf32>
      %216 = vector.broadcast %1 : f32 to vector<8x128xf32>
      %217 = arith.mulf %195, %216 : vector<8x128xf32>
      %218 = arith.addf %215, %217 : vector<8x128xf32>
      %219 = vector.broadcast %2 : f32 to vector<8x128xf32>
      %220 = arith.mulf %198, %219 : vector<8x128xf32>
      %221 = arith.addf %218, %220 : vector<8x128xf32>
      %222 = vector.broadcast %3 : f32 to vector<8x128xf32>
      %223 = arith.mulf %201, %222 : vector<8x128xf32>
      %224 = arith.addf %221, %223 : vector<8x128xf32>
      %225 = vector.broadcast %4 : f32 to vector<8x128xf32>
      %226 = arith.mulf %204, %225 : vector<8x128xf32>
      %227 = arith.addf %224, %226 : vector<8x128xf32>
      %228 = vector.broadcast %5 : f32 to vector<8x128xf32>
      %229 = arith.mulf %207, %228 : vector<8x128xf32>
      %230 = arith.addf %227, %229 : vector<8x128xf32>
      %231 = vector.broadcast %6 : f32 to vector<8x128xf32>
      %232 = arith.mulf %210, %231 : vector<8x128xf32>
      %233 = arith.addf %230, %232 : vector<8x128xf32>
      %234 = vector.broadcast %7 : f32 to vector<8x128xf32>
      %235 = arith.mulf %213, %234 : vector<8x128xf32>
      %236 = arith.addf %233, %235 : vector<8x128xf32>
      %237 = vector.broadcast %32 : f32 to vector<8x128xf32>
      %238 = arith.addf %236, %237 : vector<8x128xf32>
      %cst_76 = arith.constant 0.000000e+00 : f32
      %239 = vector.broadcast %cst_76 : f32 to vector<8x128xf32>
      %240 = arith.maximumf %238, %239 : vector<8x128xf32>
      %241 = vector.broadcast %36 : f32 to vector<8x128xf32>
      %242 = arith.mulf %240, %241 : vector<8x128xf32>
      %243 = vector.broadcast %52 : f32 to vector<8x128xf32>
      %244 = arith.mulf %240, %243 : vector<8x128xf32>
      %245 = vector.broadcast %68 : f32 to vector<8x128xf32>
      %246 = arith.mulf %240, %245 : vector<8x128xf32>
      %247 = vector.broadcast %84 : f32 to vector<8x128xf32>
      %248 = arith.mulf %240, %247 : vector<8x128xf32>
      %249 = vector.broadcast %100 : f32 to vector<8x128xf32>
      %250 = arith.mulf %240, %249 : vector<8x128xf32>
      %251 = vector.broadcast %116 : f32 to vector<8x128xf32>
      %252 = arith.mulf %240, %251 : vector<8x128xf32>
      %253 = vector.broadcast %132 : f32 to vector<8x128xf32>
      %254 = arith.mulf %240, %253 : vector<8x128xf32>
      %255 = vector.broadcast %148 : f32 to vector<8x128xf32>
      %256 = arith.mulf %240, %255 : vector<8x128xf32>
      %257 = vector.broadcast %8 : f32 to vector<8x128xf32>
      %258 = arith.mulf %192, %257 : vector<8x128xf32>
      %259 = vector.broadcast %9 : f32 to vector<8x128xf32>
      %260 = arith.mulf %195, %259 : vector<8x128xf32>
      %261 = arith.addf %258, %260 : vector<8x128xf32>
      %262 = vector.broadcast %10 : f32 to vector<8x128xf32>
      %263 = arith.mulf %198, %262 : vector<8x128xf32>
      %264 = arith.addf %261, %263 : vector<8x128xf32>
      %265 = vector.broadcast %11 : f32 to vector<8x128xf32>
      %266 = arith.mulf %201, %265 : vector<8x128xf32>
      %267 = arith.addf %264, %266 : vector<8x128xf32>
      %268 = vector.broadcast %12 : f32 to vector<8x128xf32>
      %269 = arith.mulf %204, %268 : vector<8x128xf32>
      %270 = arith.addf %267, %269 : vector<8x128xf32>
      %271 = vector.broadcast %13 : f32 to vector<8x128xf32>
      %272 = arith.mulf %207, %271 : vector<8x128xf32>
      %273 = arith.addf %270, %272 : vector<8x128xf32>
      %274 = vector.broadcast %14 : f32 to vector<8x128xf32>
      %275 = arith.mulf %210, %274 : vector<8x128xf32>
      %276 = arith.addf %273, %275 : vector<8x128xf32>
      %277 = vector.broadcast %15 : f32 to vector<8x128xf32>
      %278 = arith.mulf %213, %277 : vector<8x128xf32>
      %279 = arith.addf %276, %278 : vector<8x128xf32>
      %280 = vector.broadcast %33 : f32 to vector<8x128xf32>
      %281 = arith.addf %279, %280 : vector<8x128xf32>
      %cst_77 = arith.constant 0.000000e+00 : f32
      %282 = vector.broadcast %cst_77 : f32 to vector<8x128xf32>
      %283 = arith.maximumf %281, %282 : vector<8x128xf32>
      %284 = vector.broadcast %40 : f32 to vector<8x128xf32>
      %285 = arith.mulf %283, %284 : vector<8x128xf32>
      %286 = arith.addf %242, %285 : vector<8x128xf32>
      %287 = vector.broadcast %56 : f32 to vector<8x128xf32>
      %288 = arith.mulf %283, %287 : vector<8x128xf32>
      %289 = arith.addf %244, %288 : vector<8x128xf32>
      %290 = vector.broadcast %72 : f32 to vector<8x128xf32>
      %291 = arith.mulf %283, %290 : vector<8x128xf32>
      %292 = arith.addf %246, %291 : vector<8x128xf32>
      %293 = vector.broadcast %88 : f32 to vector<8x128xf32>
      %294 = arith.mulf %283, %293 : vector<8x128xf32>
      %295 = arith.addf %248, %294 : vector<8x128xf32>
      %296 = vector.broadcast %104 : f32 to vector<8x128xf32>
      %297 = arith.mulf %283, %296 : vector<8x128xf32>
      %298 = arith.addf %250, %297 : vector<8x128xf32>
      %299 = vector.broadcast %120 : f32 to vector<8x128xf32>
      %300 = arith.mulf %283, %299 : vector<8x128xf32>
      %301 = arith.addf %252, %300 : vector<8x128xf32>
      %302 = vector.broadcast %136 : f32 to vector<8x128xf32>
      %303 = arith.mulf %283, %302 : vector<8x128xf32>
      %304 = arith.addf %254, %303 : vector<8x128xf32>
      %305 = vector.broadcast %152 : f32 to vector<8x128xf32>
      %306 = arith.mulf %283, %305 : vector<8x128xf32>
      %307 = arith.addf %256, %306 : vector<8x128xf32>
      %308 = vector.broadcast %16 : f32 to vector<8x128xf32>
      %309 = arith.mulf %192, %308 : vector<8x128xf32>
      %310 = vector.broadcast %17 : f32 to vector<8x128xf32>
      %311 = arith.mulf %195, %310 : vector<8x128xf32>
      %312 = arith.addf %309, %311 : vector<8x128xf32>
      %313 = vector.broadcast %18 : f32 to vector<8x128xf32>
      %314 = arith.mulf %198, %313 : vector<8x128xf32>
      %315 = arith.addf %312, %314 : vector<8x128xf32>
      %316 = vector.broadcast %19 : f32 to vector<8x128xf32>
      %317 = arith.mulf %201, %316 : vector<8x128xf32>
      %318 = arith.addf %315, %317 : vector<8x128xf32>
      %319 = vector.broadcast %20 : f32 to vector<8x128xf32>
      %320 = arith.mulf %204, %319 : vector<8x128xf32>
      %321 = arith.addf %318, %320 : vector<8x128xf32>
      %322 = vector.broadcast %21 : f32 to vector<8x128xf32>
      %323 = arith.mulf %207, %322 : vector<8x128xf32>
      %324 = arith.addf %321, %323 : vector<8x128xf32>
      %325 = vector.broadcast %22 : f32 to vector<8x128xf32>
      %326 = arith.mulf %210, %325 : vector<8x128xf32>
      %327 = arith.addf %324, %326 : vector<8x128xf32>
      %328 = vector.broadcast %23 : f32 to vector<8x128xf32>
      %329 = arith.mulf %213, %328 : vector<8x128xf32>
      %330 = arith.addf %327, %329 : vector<8x128xf32>
      %331 = vector.broadcast %34 : f32 to vector<8x128xf32>
      %332 = arith.addf %330, %331 : vector<8x128xf32>
      %cst_78 = arith.constant 0.000000e+00 : f32
      %333 = vector.broadcast %cst_78 : f32 to vector<8x128xf32>
      %334 = arith.maximumf %332, %333 : vector<8x128xf32>
      %335 = vector.broadcast %44 : f32 to vector<8x128xf32>
      %336 = arith.mulf %334, %335 : vector<8x128xf32>
      %337 = arith.addf %286, %336 : vector<8x128xf32>
      %338 = vector.broadcast %60 : f32 to vector<8x128xf32>
      %339 = arith.mulf %334, %338 : vector<8x128xf32>
      %340 = arith.addf %289, %339 : vector<8x128xf32>
      %341 = vector.broadcast %76 : f32 to vector<8x128xf32>
      %342 = arith.mulf %334, %341 : vector<8x128xf32>
      %343 = arith.addf %292, %342 : vector<8x128xf32>
      %344 = vector.broadcast %92 : f32 to vector<8x128xf32>
      %345 = arith.mulf %334, %344 : vector<8x128xf32>
      %346 = arith.addf %295, %345 : vector<8x128xf32>
      %347 = vector.broadcast %108 : f32 to vector<8x128xf32>
      %348 = arith.mulf %334, %347 : vector<8x128xf32>
      %349 = arith.addf %298, %348 : vector<8x128xf32>
      %350 = vector.broadcast %124 : f32 to vector<8x128xf32>
      %351 = arith.mulf %334, %350 : vector<8x128xf32>
      %352 = arith.addf %301, %351 : vector<8x128xf32>
      %353 = vector.broadcast %140 : f32 to vector<8x128xf32>
      %354 = arith.mulf %334, %353 : vector<8x128xf32>
      %355 = arith.addf %304, %354 : vector<8x128xf32>
      %356 = vector.broadcast %156 : f32 to vector<8x128xf32>
      %357 = arith.mulf %334, %356 : vector<8x128xf32>
      %358 = arith.addf %307, %357 : vector<8x128xf32>
      %359 = vector.broadcast %24 : f32 to vector<8x128xf32>
      %360 = arith.mulf %192, %359 : vector<8x128xf32>
      %361 = vector.broadcast %25 : f32 to vector<8x128xf32>
      %362 = arith.mulf %195, %361 : vector<8x128xf32>
      %363 = arith.addf %360, %362 : vector<8x128xf32>
      %364 = vector.broadcast %26 : f32 to vector<8x128xf32>
      %365 = arith.mulf %198, %364 : vector<8x128xf32>
      %366 = arith.addf %363, %365 : vector<8x128xf32>
      %367 = vector.broadcast %27 : f32 to vector<8x128xf32>
      %368 = arith.mulf %201, %367 : vector<8x128xf32>
      %369 = arith.addf %366, %368 : vector<8x128xf32>
      %370 = vector.broadcast %28 : f32 to vector<8x128xf32>
      %371 = arith.mulf %204, %370 : vector<8x128xf32>
      %372 = arith.addf %369, %371 : vector<8x128xf32>
      %373 = vector.broadcast %29 : f32 to vector<8x128xf32>
      %374 = arith.mulf %207, %373 : vector<8x128xf32>
      %375 = arith.addf %372, %374 : vector<8x128xf32>
      %376 = vector.broadcast %30 : f32 to vector<8x128xf32>
      %377 = arith.mulf %210, %376 : vector<8x128xf32>
      %378 = arith.addf %375, %377 : vector<8x128xf32>
      %379 = vector.broadcast %31 : f32 to vector<8x128xf32>
      %380 = arith.mulf %213, %379 : vector<8x128xf32>
      %381 = arith.addf %378, %380 : vector<8x128xf32>
      %382 = vector.broadcast %35 : f32 to vector<8x128xf32>
      %383 = arith.addf %381, %382 : vector<8x128xf32>
      %cst_79 = arith.constant 0.000000e+00 : f32
      %384 = vector.broadcast %cst_79 : f32 to vector<8x128xf32>
      %385 = arith.maximumf %383, %384 : vector<8x128xf32>
      %386 = vector.broadcast %48 : f32 to vector<8x128xf32>
      %387 = arith.mulf %385, %386 : vector<8x128xf32>
      %388 = arith.addf %337, %387 : vector<8x128xf32>
      %389 = vector.broadcast %64 : f32 to vector<8x128xf32>
      %390 = arith.mulf %385, %389 : vector<8x128xf32>
      %391 = arith.addf %340, %390 : vector<8x128xf32>
      %392 = vector.broadcast %80 : f32 to vector<8x128xf32>
      %393 = arith.mulf %385, %392 : vector<8x128xf32>
      %394 = arith.addf %343, %393 : vector<8x128xf32>
      %395 = vector.broadcast %96 : f32 to vector<8x128xf32>
      %396 = arith.mulf %385, %395 : vector<8x128xf32>
      %397 = arith.addf %346, %396 : vector<8x128xf32>
      %398 = vector.broadcast %112 : f32 to vector<8x128xf32>
      %399 = arith.mulf %385, %398 : vector<8x128xf32>
      %400 = arith.addf %349, %399 : vector<8x128xf32>
      %401 = vector.broadcast %128 : f32 to vector<8x128xf32>
      %402 = arith.mulf %385, %401 : vector<8x128xf32>
      %403 = arith.addf %352, %402 : vector<8x128xf32>
      %404 = vector.broadcast %144 : f32 to vector<8x128xf32>
      %405 = arith.mulf %385, %404 : vector<8x128xf32>
      %406 = arith.addf %355, %405 : vector<8x128xf32>
      %407 = vector.broadcast %160 : f32 to vector<8x128xf32>
      %408 = arith.mulf %385, %407 : vector<8x128xf32>
      %409 = arith.addf %358, %408 : vector<8x128xf32>
      %c0_80 = arith.constant 0 : index
      %c2_81 = arith.constant 2 : index
      %410 = arith.index_cast %189 : i32 to index
      %c0_82 = arith.constant 0 : index
      %411 = vector.load %arg6[%c0_80, %c2_81, %410, %c0_82] : memref<1x32x400x128xf32, #tpu.memory_space<vmem>>, vector<1x1x8x128xf32>
      %412 = vector.shape_cast %411 : vector<1x1x8x128xf32> to vector<8x128xf32>
      %c0_83 = arith.constant 0 : index
      %c3_84 = arith.constant 3 : index
      %413 = arith.index_cast %189 : i32 to index
      %c0_85 = arith.constant 0 : index
      %414 = vector.load %arg6[%c0_83, %c3_84, %413, %c0_85] : memref<1x32x400x128xf32, #tpu.memory_space<vmem>>, vector<1x1x8x128xf32>
      %415 = vector.shape_cast %414 : vector<1x1x8x128xf32> to vector<8x128xf32>
      %c0_86 = arith.constant 0 : index
      %c6_87 = arith.constant 6 : index
      %416 = arith.index_cast %189 : i32 to index
      %c0_88 = arith.constant 0 : index
      %417 = vector.load %arg6[%c0_86, %c6_87, %416, %c0_88] : memref<1x32x400x128xf32, #tpu.memory_space<vmem>>, vector<1x1x8x128xf32>
      %418 = vector.shape_cast %417 : vector<1x1x8x128xf32> to vector<8x128xf32>
      %c0_89 = arith.constant 0 : index
      %c7_90 = arith.constant 7 : index
      %419 = arith.index_cast %189 : i32 to index
      %c0_91 = arith.constant 0 : index
      %420 = vector.load %arg6[%c0_89, %c7_90, %419, %c0_91] : memref<1x32x400x128xf32, #tpu.memory_space<vmem>>, vector<1x1x8x128xf32>
      %421 = vector.shape_cast %420 : vector<1x1x8x128xf32> to vector<8x128xf32>
      %c0_92 = arith.constant 0 : index
      %c18_93 = arith.constant 18 : index
      %422 = arith.index_cast %189 : i32 to index
      %c0_94 = arith.constant 0 : index
      %423 = vector.load %arg6[%c0_92, %c18_93, %422, %c0_94] : memref<1x32x400x128xf32, #tpu.memory_space<vmem>>, vector<1x1x8x128xf32>
      %424 = vector.shape_cast %423 : vector<1x1x8x128xf32> to vector<8x128xf32>
      %c0_95 = arith.constant 0 : index
      %c19_96 = arith.constant 19 : index
      %425 = arith.index_cast %189 : i32 to index
      %c0_97 = arith.constant 0 : index
      %426 = vector.load %arg6[%c0_95, %c19_96, %425, %c0_97] : memref<1x32x400x128xf32, #tpu.memory_space<vmem>>, vector<1x1x8x128xf32>
      %427 = vector.shape_cast %426 : vector<1x1x8x128xf32> to vector<8x128xf32>
      %c0_98 = arith.constant 0 : index
      %c22_99 = arith.constant 22 : index
      %428 = arith.index_cast %189 : i32 to index
      %c0_100 = arith.constant 0 : index
      %429 = vector.load %arg6[%c0_98, %c22_99, %428, %c0_100] : memref<1x32x400x128xf32, #tpu.memory_space<vmem>>, vector<1x1x8x128xf32>
      %430 = vector.shape_cast %429 : vector<1x1x8x128xf32> to vector<8x128xf32>
      %c0_101 = arith.constant 0 : index
      %c23_102 = arith.constant 23 : index
      %431 = arith.index_cast %189 : i32 to index
      %c0_103 = arith.constant 0 : index
      %432 = vector.load %arg6[%c0_101, %c23_102, %431, %c0_103] : memref<1x32x400x128xf32, #tpu.memory_space<vmem>>, vector<1x1x8x128xf32>
      %433 = vector.shape_cast %432 : vector<1x1x8x128xf32> to vector<8x128xf32>
      %434 = vector.broadcast %0 : f32 to vector<8x128xf32>
      %435 = arith.mulf %412, %434 : vector<8x128xf32>
      %436 = vector.broadcast %1 : f32 to vector<8x128xf32>
      %437 = arith.mulf %415, %436 : vector<8x128xf32>
      %438 = arith.addf %435, %437 : vector<8x128xf32>
      %439 = vector.broadcast %2 : f32 to vector<8x128xf32>
      %440 = arith.mulf %418, %439 : vector<8x128xf32>
      %441 = arith.addf %438, %440 : vector<8x128xf32>
      %442 = vector.broadcast %3 : f32 to vector<8x128xf32>
      %443 = arith.mulf %421, %442 : vector<8x128xf32>
      %444 = arith.addf %441, %443 : vector<8x128xf32>
      %445 = vector.broadcast %4 : f32 to vector<8x128xf32>
      %446 = arith.mulf %424, %445 : vector<8x128xf32>
      %447 = arith.addf %444, %446 : vector<8x128xf32>
      %448 = vector.broadcast %5 : f32 to vector<8x128xf32>
      %449 = arith.mulf %427, %448 : vector<8x128xf32>
      %450 = arith.addf %447, %449 : vector<8x128xf32>
      %451 = vector.broadcast %6 : f32 to vector<8x128xf32>
      %452 = arith.mulf %430, %451 : vector<8x128xf32>
      %453 = arith.addf %450, %452 : vector<8x128xf32>
      %454 = vector.broadcast %7 : f32 to vector<8x128xf32>
      %455 = arith.mulf %433, %454 : vector<8x128xf32>
      %456 = arith.addf %453, %455 : vector<8x128xf32>
      %457 = vector.broadcast %32 : f32 to vector<8x128xf32>
      %458 = arith.addf %456, %457 : vector<8x128xf32>
      %cst_104 = arith.constant 0.000000e+00 : f32
      %459 = vector.broadcast %cst_104 : f32 to vector<8x128xf32>
      %460 = arith.maximumf %458, %459 : vector<8x128xf32>
      %461 = vector.broadcast %37 : f32 to vector<8x128xf32>
      %462 = arith.mulf %460, %461 : vector<8x128xf32>
      %463 = arith.addf %388, %462 : vector<8x128xf32>
      %464 = vector.broadcast %53 : f32 to vector<8x128xf32>
      %465 = arith.mulf %460, %464 : vector<8x128xf32>
      %466 = arith.addf %391, %465 : vector<8x128xf32>
      %467 = vector.broadcast %69 : f32 to vector<8x128xf32>
      %468 = arith.mulf %460, %467 : vector<8x128xf32>
      %469 = arith.addf %394, %468 : vector<8x128xf32>
      %470 = vector.broadcast %85 : f32 to vector<8x128xf32>
      %471 = arith.mulf %460, %470 : vector<8x128xf32>
      %472 = arith.addf %397, %471 : vector<8x128xf32>
      %473 = vector.broadcast %101 : f32 to vector<8x128xf32>
      %474 = arith.mulf %460, %473 : vector<8x128xf32>
      %475 = arith.addf %400, %474 : vector<8x128xf32>
      %476 = vector.broadcast %117 : f32 to vector<8x128xf32>
      %477 = arith.mulf %460, %476 : vector<8x128xf32>
      %478 = arith.addf %403, %477 : vector<8x128xf32>
      %479 = vector.broadcast %133 : f32 to vector<8x128xf32>
      %480 = arith.mulf %460, %479 : vector<8x128xf32>
      %481 = arith.addf %406, %480 : vector<8x128xf32>
      %482 = vector.broadcast %149 : f32 to vector<8x128xf32>
      %483 = arith.mulf %460, %482 : vector<8x128xf32>
      %484 = arith.addf %409, %483 : vector<8x128xf32>
      %485 = vector.broadcast %8 : f32 to vector<8x128xf32>
      %486 = arith.mulf %412, %485 : vector<8x128xf32>
      %487 = vector.broadcast %9 : f32 to vector<8x128xf32>
      %488 = arith.mulf %415, %487 : vector<8x128xf32>
      %489 = arith.addf %486, %488 : vector<8x128xf32>
      %490 = vector.broadcast %10 : f32 to vector<8x128xf32>
      %491 = arith.mulf %418, %490 : vector<8x128xf32>
      %492 = arith.addf %489, %491 : vector<8x128xf32>
      %493 = vector.broadcast %11 : f32 to vector<8x128xf32>
      %494 = arith.mulf %421, %493 : vector<8x128xf32>
      %495 = arith.addf %492, %494 : vector<8x128xf32>
      %496 = vector.broadcast %12 : f32 to vector<8x128xf32>
      %497 = arith.mulf %424, %496 : vector<8x128xf32>
      %498 = arith.addf %495, %497 : vector<8x128xf32>
      %499 = vector.broadcast %13 : f32 to vector<8x128xf32>
      %500 = arith.mulf %427, %499 : vector<8x128xf32>
      %501 = arith.addf %498, %500 : vector<8x128xf32>
      %502 = vector.broadcast %14 : f32 to vector<8x128xf32>
      %503 = arith.mulf %430, %502 : vector<8x128xf32>
      %504 = arith.addf %501, %503 : vector<8x128xf32>
      %505 = vector.broadcast %15 : f32 to vector<8x128xf32>
      %506 = arith.mulf %433, %505 : vector<8x128xf32>
      %507 = arith.addf %504, %506 : vector<8x128xf32>
      %508 = vector.broadcast %33 : f32 to vector<8x128xf32>
      %509 = arith.addf %507, %508 : vector<8x128xf32>
      %cst_105 = arith.constant 0.000000e+00 : f32
      %510 = vector.broadcast %cst_105 : f32 to vector<8x128xf32>
      %511 = arith.maximumf %509, %510 : vector<8x128xf32>
      %512 = vector.broadcast %41 : f32 to vector<8x128xf32>
      %513 = arith.mulf %511, %512 : vector<8x128xf32>
      %514 = arith.addf %463, %513 : vector<8x128xf32>
      %515 = vector.broadcast %57 : f32 to vector<8x128xf32>
      %516 = arith.mulf %511, %515 : vector<8x128xf32>
      %517 = arith.addf %466, %516 : vector<8x128xf32>
      %518 = vector.broadcast %73 : f32 to vector<8x128xf32>
      %519 = arith.mulf %511, %518 : vector<8x128xf32>
      %520 = arith.addf %469, %519 : vector<8x128xf32>
      %521 = vector.broadcast %89 : f32 to vector<8x128xf32>
      %522 = arith.mulf %511, %521 : vector<8x128xf32>
      %523 = arith.addf %472, %522 : vector<8x128xf32>
      %524 = vector.broadcast %105 : f32 to vector<8x128xf32>
      %525 = arith.mulf %511, %524 : vector<8x128xf32>
      %526 = arith.addf %475, %525 : vector<8x128xf32>
      %527 = vector.broadcast %121 : f32 to vector<8x128xf32>
      %528 = arith.mulf %511, %527 : vector<8x128xf32>
      %529 = arith.addf %478, %528 : vector<8x128xf32>
      %530 = vector.broadcast %137 : f32 to vector<8x128xf32>
      %531 = arith.mulf %511, %530 : vector<8x128xf32>
      %532 = arith.addf %481, %531 : vector<8x128xf32>
      %533 = vector.broadcast %153 : f32 to vector<8x128xf32>
      %534 = arith.mulf %511, %533 : vector<8x128xf32>
      %535 = arith.addf %484, %534 : vector<8x128xf32>
      %536 = vector.broadcast %16 : f32 to vector<8x128xf32>
      %537 = arith.mulf %412, %536 : vector<8x128xf32>
      %538 = vector.broadcast %17 : f32 to vector<8x128xf32>
      %539 = arith.mulf %415, %538 : vector<8x128xf32>
      %540 = arith.addf %537, %539 : vector<8x128xf32>
      %541 = vector.broadcast %18 : f32 to vector<8x128xf32>
      %542 = arith.mulf %418, %541 : vector<8x128xf32>
      %543 = arith.addf %540, %542 : vector<8x128xf32>
      %544 = vector.broadcast %19 : f32 to vector<8x128xf32>
      %545 = arith.mulf %421, %544 : vector<8x128xf32>
      %546 = arith.addf %543, %545 : vector<8x128xf32>
      %547 = vector.broadcast %20 : f32 to vector<8x128xf32>
      %548 = arith.mulf %424, %547 : vector<8x128xf32>
      %549 = arith.addf %546, %548 : vector<8x128xf32>
      %550 = vector.broadcast %21 : f32 to vector<8x128xf32>
      %551 = arith.mulf %427, %550 : vector<8x128xf32>
      %552 = arith.addf %549, %551 : vector<8x128xf32>
      %553 = vector.broadcast %22 : f32 to vector<8x128xf32>
      %554 = arith.mulf %430, %553 : vector<8x128xf32>
      %555 = arith.addf %552, %554 : vector<8x128xf32>
      %556 = vector.broadcast %23 : f32 to vector<8x128xf32>
      %557 = arith.mulf %433, %556 : vector<8x128xf32>
      %558 = arith.addf %555, %557 : vector<8x128xf32>
      %559 = vector.broadcast %34 : f32 to vector<8x128xf32>
      %560 = arith.addf %558, %559 : vector<8x128xf32>
      %cst_106 = arith.constant 0.000000e+00 : f32
      %561 = vector.broadcast %cst_106 : f32 to vector<8x128xf32>
      %562 = arith.maximumf %560, %561 : vector<8x128xf32>
      %563 = vector.broadcast %45 : f32 to vector<8x128xf32>
      %564 = arith.mulf %562, %563 : vector<8x128xf32>
      %565 = arith.addf %514, %564 : vector<8x128xf32>
      %566 = vector.broadcast %61 : f32 to vector<8x128xf32>
      %567 = arith.mulf %562, %566 : vector<8x128xf32>
      %568 = arith.addf %517, %567 : vector<8x128xf32>
      %569 = vector.broadcast %77 : f32 to vector<8x128xf32>
      %570 = arith.mulf %562, %569 : vector<8x128xf32>
      %571 = arith.addf %520, %570 : vector<8x128xf32>
      %572 = vector.broadcast %93 : f32 to vector<8x128xf32>
      %573 = arith.mulf %562, %572 : vector<8x128xf32>
      %574 = arith.addf %523, %573 : vector<8x128xf32>
      %575 = vector.broadcast %109 : f32 to vector<8x128xf32>
      %576 = arith.mulf %562, %575 : vector<8x128xf32>
      %577 = arith.addf %526, %576 : vector<8x128xf32>
      %578 = vector.broadcast %125 : f32 to vector<8x128xf32>
      %579 = arith.mulf %562, %578 : vector<8x128xf32>
      %580 = arith.addf %529, %579 : vector<8x128xf32>
      %581 = vector.broadcast %141 : f32 to vector<8x128xf32>
      %582 = arith.mulf %562, %581 : vector<8x128xf32>
      %583 = arith.addf %532, %582 : vector<8x128xf32>
      %584 = vector.broadcast %157 : f32 to vector<8x128xf32>
      %585 = arith.mulf %562, %584 : vector<8x128xf32>
      %586 = arith.addf %535, %585 : vector<8x128xf32>
      %587 = vector.broadcast %24 : f32 to vector<8x128xf32>
      %588 = arith.mulf %412, %587 : vector<8x128xf32>
      %589 = vector.broadcast %25 : f32 to vector<8x128xf32>
      %590 = arith.mulf %415, %589 : vector<8x128xf32>
      %591 = arith.addf %588, %590 : vector<8x128xf32>
      %592 = vector.broadcast %26 : f32 to vector<8x128xf32>
      %593 = arith.mulf %418, %592 : vector<8x128xf32>
      %594 = arith.addf %591, %593 : vector<8x128xf32>
      %595 = vector.broadcast %27 : f32 to vector<8x128xf32>
      %596 = arith.mulf %421, %595 : vector<8x128xf32>
      %597 = arith.addf %594, %596 : vector<8x128xf32>
      %598 = vector.broadcast %28 : f32 to vector<8x128xf32>
      %599 = arith.mulf %424, %598 : vector<8x128xf32>
      %600 = arith.addf %597, %599 : vector<8x128xf32>
      %601 = vector.broadcast %29 : f32 to vector<8x128xf32>
      %602 = arith.mulf %427, %601 : vector<8x128xf32>
      %603 = arith.addf %600, %602 : vector<8x128xf32>
      %604 = vector.broadcast %30 : f32 to vector<8x128xf32>
      %605 = arith.mulf %430, %604 : vector<8x128xf32>
      %606 = arith.addf %603, %605 : vector<8x128xf32>
      %607 = vector.broadcast %31 : f32 to vector<8x128xf32>
      %608 = arith.mulf %433, %607 : vector<8x128xf32>
      %609 = arith.addf %606, %608 : vector<8x128xf32>
      %610 = vector.broadcast %35 : f32 to vector<8x128xf32>
      %611 = arith.addf %609, %610 : vector<8x128xf32>
      %cst_107 = arith.constant 0.000000e+00 : f32
      %612 = vector.broadcast %cst_107 : f32 to vector<8x128xf32>
      %613 = arith.maximumf %611, %612 : vector<8x128xf32>
      %614 = vector.broadcast %49 : f32 to vector<8x128xf32>
      %615 = arith.mulf %613, %614 : vector<8x128xf32>
      %616 = arith.addf %565, %615 : vector<8x128xf32>
      %617 = vector.broadcast %65 : f32 to vector<8x128xf32>
      %618 = arith.mulf %613, %617 : vector<8x128xf32>
      %619 = arith.addf %568, %618 : vector<8x128xf32>
      %620 = vector.broadcast %81 : f32 to vector<8x128xf32>
      %621 = arith.mulf %613, %620 : vector<8x128xf32>
      %622 = arith.addf %571, %621 : vector<8x128xf32>
      %623 = vector.broadcast %97 : f32 to vector<8x128xf32>
      %624 = arith.mulf %613, %623 : vector<8x128xf32>
      %625 = arith.addf %574, %624 : vector<8x128xf32>
      %626 = vector.broadcast %113 : f32 to vector<8x128xf32>
      %627 = arith.mulf %613, %626 : vector<8x128xf32>
      %628 = arith.addf %577, %627 : vector<8x128xf32>
      %629 = vector.broadcast %129 : f32 to vector<8x128xf32>
      %630 = arith.mulf %613, %629 : vector<8x128xf32>
      %631 = arith.addf %580, %630 : vector<8x128xf32>
      %632 = vector.broadcast %145 : f32 to vector<8x128xf32>
      %633 = arith.mulf %613, %632 : vector<8x128xf32>
      %634 = arith.addf %583, %633 : vector<8x128xf32>
      %635 = vector.broadcast %161 : f32 to vector<8x128xf32>
      %636 = arith.mulf %613, %635 : vector<8x128xf32>
      %637 = arith.addf %586, %636 : vector<8x128xf32>
      %c0_108 = arith.constant 0 : index
      %c8_109 = arith.constant 8 : index
      %638 = arith.index_cast %189 : i32 to index
      %c0_110 = arith.constant 0 : index
      %639 = vector.load %arg6[%c0_108, %c8_109, %638, %c0_110] : memref<1x32x400x128xf32, #tpu.memory_space<vmem>>, vector<1x1x8x128xf32>
      %640 = vector.shape_cast %639 : vector<1x1x8x128xf32> to vector<8x128xf32>
      %c0_111 = arith.constant 0 : index
      %c9_112 = arith.constant 9 : index
      %641 = arith.index_cast %189 : i32 to index
      %c0_113 = arith.constant 0 : index
      %642 = vector.load %arg6[%c0_111, %c9_112, %641, %c0_113] : memref<1x32x400x128xf32, #tpu.memory_space<vmem>>, vector<1x1x8x128xf32>
      %643 = vector.shape_cast %642 : vector<1x1x8x128xf32> to vector<8x128xf32>
      %c0_114 = arith.constant 0 : index
      %c12_115 = arith.constant 12 : index
      %644 = arith.index_cast %189 : i32 to index
      %c0_116 = arith.constant 0 : index
      %645 = vector.load %arg6[%c0_114, %c12_115, %644, %c0_116] : memref<1x32x400x128xf32, #tpu.memory_space<vmem>>, vector<1x1x8x128xf32>
      %646 = vector.shape_cast %645 : vector<1x1x8x128xf32> to vector<8x128xf32>
      %c0_117 = arith.constant 0 : index
      %c13_118 = arith.constant 13 : index
      %647 = arith.index_cast %189 : i32 to index
      %c0_119 = arith.constant 0 : index
      %648 = vector.load %arg6[%c0_117, %c13_118, %647, %c0_119] : memref<1x32x400x128xf32, #tpu.memory_space<vmem>>, vector<1x1x8x128xf32>
      %649 = vector.shape_cast %648 : vector<1x1x8x128xf32> to vector<8x128xf32>
      %c0_120 = arith.constant 0 : index
      %c24_121 = arith.constant 24 : index
      %650 = arith.index_cast %189 : i32 to index
      %c0_122 = arith.constant 0 : index
      %651 = vector.load %arg6[%c0_120, %c24_121, %650, %c0_122] : memref<1x32x400x128xf32, #tpu.memory_space<vmem>>, vector<1x1x8x128xf32>
      %652 = vector.shape_cast %651 : vector<1x1x8x128xf32> to vector<8x128xf32>
      %c0_123 = arith.constant 0 : index
      %c25_124 = arith.constant 25 : index
      %653 = arith.index_cast %189 : i32 to index
      %c0_125 = arith.constant 0 : index
      %654 = vector.load %arg6[%c0_123, %c25_124, %653, %c0_125] : memref<1x32x400x128xf32, #tpu.memory_space<vmem>>, vector<1x1x8x128xf32>
      %655 = vector.shape_cast %654 : vector<1x1x8x128xf32> to vector<8x128xf32>
      %c0_126 = arith.constant 0 : index
      %c28_127 = arith.constant 28 : index
      %656 = arith.index_cast %189 : i32 to index
      %c0_128 = arith.constant 0 : index
      %657 = vector.load %arg6[%c0_126, %c28_127, %656, %c0_128] : memref<1x32x400x128xf32, #tpu.memory_space<vmem>>, vector<1x1x8x128xf32>
      %658 = vector.shape_cast %657 : vector<1x1x8x128xf32> to vector<8x128xf32>
      %c0_129 = arith.constant 0 : index
      %c29_130 = arith.constant 29 : index
      %659 = arith.index_cast %189 : i32 to index
      %c0_131 = arith.constant 0 : index
      %660 = vector.load %arg6[%c0_129, %c29_130, %659, %c0_131] : memref<1x32x400x128xf32, #tpu.memory_space<vmem>>, vector<1x1x8x128xf32>
      %661 = vector.shape_cast %660 : vector<1x1x8x128xf32> to vector<8x128xf32>
      %662 = vector.broadcast %0 : f32 to vector<8x128xf32>
      %663 = arith.mulf %640, %662 : vector<8x128xf32>
      %664 = vector.broadcast %1 : f32 to vector<8x128xf32>
      %665 = arith.mulf %643, %664 : vector<8x128xf32>
      %666 = arith.addf %663, %665 : vector<8x128xf32>
      %667 = vector.broadcast %2 : f32 to vector<8x128xf32>
      %668 = arith.mulf %646, %667 : vector<8x128xf32>
      %669 = arith.addf %666, %668 : vector<8x128xf32>
      %670 = vector.broadcast %3 : f32 to vector<8x128xf32>
      %671 = arith.mulf %649, %670 : vector<8x128xf32>
      %672 = arith.addf %669, %671 : vector<8x128xf32>
      %673 = vector.broadcast %4 : f32 to vector<8x128xf32>
      %674 = arith.mulf %652, %673 : vector<8x128xf32>
      %675 = arith.addf %672, %674 : vector<8x128xf32>
      %676 = vector.broadcast %5 : f32 to vector<8x128xf32>
      %677 = arith.mulf %655, %676 : vector<8x128xf32>
      %678 = arith.addf %675, %677 : vector<8x128xf32>
      %679 = vector.broadcast %6 : f32 to vector<8x128xf32>
      %680 = arith.mulf %658, %679 : vector<8x128xf32>
      %681 = arith.addf %678, %680 : vector<8x128xf32>
      %682 = vector.broadcast %7 : f32 to vector<8x128xf32>
      %683 = arith.mulf %661, %682 : vector<8x128xf32>
      %684 = arith.addf %681, %683 : vector<8x128xf32>
      %685 = vector.broadcast %32 : f32 to vector<8x128xf32>
      %686 = arith.addf %684, %685 : vector<8x128xf32>
      %cst_132 = arith.constant 0.000000e+00 : f32
      %687 = vector.broadcast %cst_132 : f32 to vector<8x128xf32>
      %688 = arith.maximumf %686, %687 : vector<8x128xf32>
      %689 = vector.broadcast %38 : f32 to vector<8x128xf32>
      %690 = arith.mulf %688, %689 : vector<8x128xf32>
      %691 = arith.addf %616, %690 : vector<8x128xf32>
      %692 = vector.broadcast %54 : f32 to vector<8x128xf32>
      %693 = arith.mulf %688, %692 : vector<8x128xf32>
      %694 = arith.addf %619, %693 : vector<8x128xf32>
      %695 = vector.broadcast %70 : f32 to vector<8x128xf32>
      %696 = arith.mulf %688, %695 : vector<8x128xf32>
      %697 = arith.addf %622, %696 : vector<8x128xf32>
      %698 = vector.broadcast %86 : f32 to vector<8x128xf32>
      %699 = arith.mulf %688, %698 : vector<8x128xf32>
      %700 = arith.addf %625, %699 : vector<8x128xf32>
      %701 = vector.broadcast %102 : f32 to vector<8x128xf32>
      %702 = arith.mulf %688, %701 : vector<8x128xf32>
      %703 = arith.addf %628, %702 : vector<8x128xf32>
      %704 = vector.broadcast %118 : f32 to vector<8x128xf32>
      %705 = arith.mulf %688, %704 : vector<8x128xf32>
      %706 = arith.addf %631, %705 : vector<8x128xf32>
      %707 = vector.broadcast %134 : f32 to vector<8x128xf32>
      %708 = arith.mulf %688, %707 : vector<8x128xf32>
      %709 = arith.addf %634, %708 : vector<8x128xf32>
      %710 = vector.broadcast %150 : f32 to vector<8x128xf32>
      %711 = arith.mulf %688, %710 : vector<8x128xf32>
      %712 = arith.addf %637, %711 : vector<8x128xf32>
      %713 = vector.broadcast %8 : f32 to vector<8x128xf32>
      %714 = arith.mulf %640, %713 : vector<8x128xf32>
      %715 = vector.broadcast %9 : f32 to vector<8x128xf32>
      %716 = arith.mulf %643, %715 : vector<8x128xf32>
      %717 = arith.addf %714, %716 : vector<8x128xf32>
      %718 = vector.broadcast %10 : f32 to vector<8x128xf32>
      %719 = arith.mulf %646, %718 : vector<8x128xf32>
      %720 = arith.addf %717, %719 : vector<8x128xf32>
      %721 = vector.broadcast %11 : f32 to vector<8x128xf32>
      %722 = arith.mulf %649, %721 : vector<8x128xf32>
      %723 = arith.addf %720, %722 : vector<8x128xf32>
      %724 = vector.broadcast %12 : f32 to vector<8x128xf32>
      %725 = arith.mulf %652, %724 : vector<8x128xf32>
      %726 = arith.addf %723, %725 : vector<8x128xf32>
      %727 = vector.broadcast %13 : f32 to vector<8x128xf32>
      %728 = arith.mulf %655, %727 : vector<8x128xf32>
      %729 = arith.addf %726, %728 : vector<8x128xf32>
      %730 = vector.broadcast %14 : f32 to vector<8x128xf32>
      %731 = arith.mulf %658, %730 : vector<8x128xf32>
      %732 = arith.addf %729, %731 : vector<8x128xf32>
      %733 = vector.broadcast %15 : f32 to vector<8x128xf32>
      %734 = arith.mulf %661, %733 : vector<8x128xf32>
      %735 = arith.addf %732, %734 : vector<8x128xf32>
      %736 = vector.broadcast %33 : f32 to vector<8x128xf32>
      %737 = arith.addf %735, %736 : vector<8x128xf32>
      %cst_133 = arith.constant 0.000000e+00 : f32
      %738 = vector.broadcast %cst_133 : f32 to vector<8x128xf32>
      %739 = arith.maximumf %737, %738 : vector<8x128xf32>
      %740 = vector.broadcast %42 : f32 to vector<8x128xf32>
      %741 = arith.mulf %739, %740 : vector<8x128xf32>
      %742 = arith.addf %691, %741 : vector<8x128xf32>
      %743 = vector.broadcast %58 : f32 to vector<8x128xf32>
      %744 = arith.mulf %739, %743 : vector<8x128xf32>
      %745 = arith.addf %694, %744 : vector<8x128xf32>
      %746 = vector.broadcast %74 : f32 to vector<8x128xf32>
      %747 = arith.mulf %739, %746 : vector<8x128xf32>
      %748 = arith.addf %697, %747 : vector<8x128xf32>
      %749 = vector.broadcast %90 : f32 to vector<8x128xf32>
      %750 = arith.mulf %739, %749 : vector<8x128xf32>
      %751 = arith.addf %700, %750 : vector<8x128xf32>
      %752 = vector.broadcast %106 : f32 to vector<8x128xf32>
      %753 = arith.mulf %739, %752 : vector<8x128xf32>
      %754 = arith.addf %703, %753 : vector<8x128xf32>
      %755 = vector.broadcast %122 : f32 to vector<8x128xf32>
      %756 = arith.mulf %739, %755 : vector<8x128xf32>
      %757 = arith.addf %706, %756 : vector<8x128xf32>
      %758 = vector.broadcast %138 : f32 to vector<8x128xf32>
      %759 = arith.mulf %739, %758 : vector<8x128xf32>
      %760 = arith.addf %709, %759 : vector<8x128xf32>
      %761 = vector.broadcast %154 : f32 to vector<8x128xf32>
      %762 = arith.mulf %739, %761 : vector<8x128xf32>
      %763 = arith.addf %712, %762 : vector<8x128xf32>
      %764 = vector.broadcast %16 : f32 to vector<8x128xf32>
      %765 = arith.mulf %640, %764 : vector<8x128xf32>
      %766 = vector.broadcast %17 : f32 to vector<8x128xf32>
      %767 = arith.mulf %643, %766 : vector<8x128xf32>
      %768 = arith.addf %765, %767 : vector<8x128xf32>
      %769 = vector.broadcast %18 : f32 to vector<8x128xf32>
      %770 = arith.mulf %646, %769 : vector<8x128xf32>
      %771 = arith.addf %768, %770 : vector<8x128xf32>
      %772 = vector.broadcast %19 : f32 to vector<8x128xf32>
      %773 = arith.mulf %649, %772 : vector<8x128xf32>
      %774 = arith.addf %771, %773 : vector<8x128xf32>
      %775 = vector.broadcast %20 : f32 to vector<8x128xf32>
      %776 = arith.mulf %652, %775 : vector<8x128xf32>
      %777 = arith.addf %774, %776 : vector<8x128xf32>
      %778 = vector.broadcast %21 : f32 to vector<8x128xf32>
      %779 = arith.mulf %655, %778 : vector<8x128xf32>
      %780 = arith.addf %777, %779 : vector<8x128xf32>
      %781 = vector.broadcast %22 : f32 to vector<8x128xf32>
      %782 = arith.mulf %658, %781 : vector<8x128xf32>
      %783 = arith.addf %780, %782 : vector<8x128xf32>
      %784 = vector.broadcast %23 : f32 to vector<8x128xf32>
      %785 = arith.mulf %661, %784 : vector<8x128xf32>
      %786 = arith.addf %783, %785 : vector<8x128xf32>
      %787 = vector.broadcast %34 : f32 to vector<8x128xf32>
      %788 = arith.addf %786, %787 : vector<8x128xf32>
      %cst_134 = arith.constant 0.000000e+00 : f32
      %789 = vector.broadcast %cst_134 : f32 to vector<8x128xf32>
      %790 = arith.maximumf %788, %789 : vector<8x128xf32>
      %791 = vector.broadcast %46 : f32 to vector<8x128xf32>
      %792 = arith.mulf %790, %791 : vector<8x128xf32>
      %793 = arith.addf %742, %792 : vector<8x128xf32>
      %794 = vector.broadcast %62 : f32 to vector<8x128xf32>
      %795 = arith.mulf %790, %794 : vector<8x128xf32>
      %796 = arith.addf %745, %795 : vector<8x128xf32>
      %797 = vector.broadcast %78 : f32 to vector<8x128xf32>
      %798 = arith.mulf %790, %797 : vector<8x128xf32>
      %799 = arith.addf %748, %798 : vector<8x128xf32>
      %800 = vector.broadcast %94 : f32 to vector<8x128xf32>
      %801 = arith.mulf %790, %800 : vector<8x128xf32>
      %802 = arith.addf %751, %801 : vector<8x128xf32>
      %803 = vector.broadcast %110 : f32 to vector<8x128xf32>
      %804 = arith.mulf %790, %803 : vector<8x128xf32>
      %805 = arith.addf %754, %804 : vector<8x128xf32>
      %806 = vector.broadcast %126 : f32 to vector<8x128xf32>
      %807 = arith.mulf %790, %806 : vector<8x128xf32>
      %808 = arith.addf %757, %807 : vector<8x128xf32>
      %809 = vector.broadcast %142 : f32 to vector<8x128xf32>
      %810 = arith.mulf %790, %809 : vector<8x128xf32>
      %811 = arith.addf %760, %810 : vector<8x128xf32>
      %812 = vector.broadcast %158 : f32 to vector<8x128xf32>
      %813 = arith.mulf %790, %812 : vector<8x128xf32>
      %814 = arith.addf %763, %813 : vector<8x128xf32>
      %815 = vector.broadcast %24 : f32 to vector<8x128xf32>
      %816 = arith.mulf %640, %815 : vector<8x128xf32>
      %817 = vector.broadcast %25 : f32 to vector<8x128xf32>
      %818 = arith.mulf %643, %817 : vector<8x128xf32>
      %819 = arith.addf %816, %818 : vector<8x128xf32>
      %820 = vector.broadcast %26 : f32 to vector<8x128xf32>
      %821 = arith.mulf %646, %820 : vector<8x128xf32>
      %822 = arith.addf %819, %821 : vector<8x128xf32>
      %823 = vector.broadcast %27 : f32 to vector<8x128xf32>
      %824 = arith.mulf %649, %823 : vector<8x128xf32>
      %825 = arith.addf %822, %824 : vector<8x128xf32>
      %826 = vector.broadcast %28 : f32 to vector<8x128xf32>
      %827 = arith.mulf %652, %826 : vector<8x128xf32>
      %828 = arith.addf %825, %827 : vector<8x128xf32>
      %829 = vector.broadcast %29 : f32 to vector<8x128xf32>
      %830 = arith.mulf %655, %829 : vector<8x128xf32>
      %831 = arith.addf %828, %830 : vector<8x128xf32>
      %832 = vector.broadcast %30 : f32 to vector<8x128xf32>
      %833 = arith.mulf %658, %832 : vector<8x128xf32>
      %834 = arith.addf %831, %833 : vector<8x128xf32>
      %835 = vector.broadcast %31 : f32 to vector<8x128xf32>
      %836 = arith.mulf %661, %835 : vector<8x128xf32>
      %837 = arith.addf %834, %836 : vector<8x128xf32>
      %838 = vector.broadcast %35 : f32 to vector<8x128xf32>
      %839 = arith.addf %837, %838 : vector<8x128xf32>
      %cst_135 = arith.constant 0.000000e+00 : f32
      %840 = vector.broadcast %cst_135 : f32 to vector<8x128xf32>
      %841 = arith.maximumf %839, %840 : vector<8x128xf32>
      %842 = vector.broadcast %50 : f32 to vector<8x128xf32>
      %843 = arith.mulf %841, %842 : vector<8x128xf32>
      %844 = arith.addf %793, %843 : vector<8x128xf32>
      %845 = vector.broadcast %66 : f32 to vector<8x128xf32>
      %846 = arith.mulf %841, %845 : vector<8x128xf32>
      %847 = arith.addf %796, %846 : vector<8x128xf32>
      %848 = vector.broadcast %82 : f32 to vector<8x128xf32>
      %849 = arith.mulf %841, %848 : vector<8x128xf32>
      %850 = arith.addf %799, %849 : vector<8x128xf32>
      %851 = vector.broadcast %98 : f32 to vector<8x128xf32>
      %852 = arith.mulf %841, %851 : vector<8x128xf32>
      %853 = arith.addf %802, %852 : vector<8x128xf32>
      %854 = vector.broadcast %114 : f32 to vector<8x128xf32>
      %855 = arith.mulf %841, %854 : vector<8x128xf32>
      %856 = arith.addf %805, %855 : vector<8x128xf32>
      %857 = vector.broadcast %130 : f32 to vector<8x128xf32>
      %858 = arith.mulf %841, %857 : vector<8x128xf32>
      %859 = arith.addf %808, %858 : vector<8x128xf32>
      %860 = vector.broadcast %146 : f32 to vector<8x128xf32>
      %861 = arith.mulf %841, %860 : vector<8x128xf32>
      %862 = arith.addf %811, %861 : vector<8x128xf32>
      %863 = vector.broadcast %162 : f32 to vector<8x128xf32>
      %864 = arith.mulf %841, %863 : vector<8x128xf32>
      %865 = arith.addf %814, %864 : vector<8x128xf32>
      %c0_136 = arith.constant 0 : index
      %c10_137 = arith.constant 10 : index
      %866 = arith.index_cast %189 : i32 to index
      %c0_138 = arith.constant 0 : index
      %867 = vector.load %arg6[%c0_136, %c10_137, %866, %c0_138] : memref<1x32x400x128xf32, #tpu.memory_space<vmem>>, vector<1x1x8x128xf32>
      %868 = vector.shape_cast %867 : vector<1x1x8x128xf32> to vector<8x128xf32>
      %c0_139 = arith.constant 0 : index
      %c11_140 = arith.constant 11 : index
      %869 = arith.index_cast %189 : i32 to index
      %c0_141 = arith.constant 0 : index
      %870 = vector.load %arg6[%c0_139, %c11_140, %869, %c0_141] : memref<1x32x400x128xf32, #tpu.memory_space<vmem>>, vector<1x1x8x128xf32>
      %871 = vector.shape_cast %870 : vector<1x1x8x128xf32> to vector<8x128xf32>
      %c0_142 = arith.constant 0 : index
      %c14_143 = arith.constant 14 : index
      %872 = arith.index_cast %189 : i32 to index
      %c0_144 = arith.constant 0 : index
      %873 = vector.load %arg6[%c0_142, %c14_143, %872, %c0_144] : memref<1x32x400x128xf32, #tpu.memory_space<vmem>>, vector<1x1x8x128xf32>
      %874 = vector.shape_cast %873 : vector<1x1x8x128xf32> to vector<8x128xf32>
      %c0_145 = arith.constant 0 : index
      %c15_146 = arith.constant 15 : index
      %875 = arith.index_cast %189 : i32 to index
      %c0_147 = arith.constant 0 : index
      %876 = vector.load %arg6[%c0_145, %c15_146, %875, %c0_147] : memref<1x32x400x128xf32, #tpu.memory_space<vmem>>, vector<1x1x8x128xf32>
      %877 = vector.shape_cast %876 : vector<1x1x8x128xf32> to vector<8x128xf32>
      %c0_148 = arith.constant 0 : index
      %c26_149 = arith.constant 26 : index
      %878 = arith.index_cast %189 : i32 to index
      %c0_150 = arith.constant 0 : index
      %879 = vector.load %arg6[%c0_148, %c26_149, %878, %c0_150] : memref<1x32x400x128xf32, #tpu.memory_space<vmem>>, vector<1x1x8x128xf32>
      %880 = vector.shape_cast %879 : vector<1x1x8x128xf32> to vector<8x128xf32>
      %c0_151 = arith.constant 0 : index
      %c27_152 = arith.constant 27 : index
      %881 = arith.index_cast %189 : i32 to index
      %c0_153 = arith.constant 0 : index
      %882 = vector.load %arg6[%c0_151, %c27_152, %881, %c0_153] : memref<1x32x400x128xf32, #tpu.memory_space<vmem>>, vector<1x1x8x128xf32>
      %883 = vector.shape_cast %882 : vector<1x1x8x128xf32> to vector<8x128xf32>
      %c0_154 = arith.constant 0 : index
      %c30_155 = arith.constant 30 : index
      %884 = arith.index_cast %189 : i32 to index
      %c0_156 = arith.constant 0 : index
      %885 = vector.load %arg6[%c0_154, %c30_155, %884, %c0_156] : memref<1x32x400x128xf32, #tpu.memory_space<vmem>>, vector<1x1x8x128xf32>
      %886 = vector.shape_cast %885 : vector<1x1x8x128xf32> to vector<8x128xf32>
      %c0_157 = arith.constant 0 : index
      %c31_158 = arith.constant 31 : index
      %887 = arith.index_cast %189 : i32 to index
      %c0_159 = arith.constant 0 : index
      %888 = vector.load %arg6[%c0_157, %c31_158, %887, %c0_159] : memref<1x32x400x128xf32, #tpu.memory_space<vmem>>, vector<1x1x8x128xf32>
      %889 = vector.shape_cast %888 : vector<1x1x8x128xf32> to vector<8x128xf32>
      %890 = vector.broadcast %0 : f32 to vector<8x128xf32>
      %891 = arith.mulf %868, %890 : vector<8x128xf32>
      %892 = vector.broadcast %1 : f32 to vector<8x128xf32>
      %893 = arith.mulf %871, %892 : vector<8x128xf32>
      %894 = arith.addf %891, %893 : vector<8x128xf32>
      %895 = vector.broadcast %2 : f32 to vector<8x128xf32>
      %896 = arith.mulf %874, %895 : vector<8x128xf32>
      %897 = arith.addf %894, %896 : vector<8x128xf32>
      %898 = vector.broadcast %3 : f32 to vector<8x128xf32>
      %899 = arith.mulf %877, %898 : vector<8x128xf32>
      %900 = arith.addf %897, %899 : vector<8x128xf32>
      %901 = vector.broadcast %4 : f32 to vector<8x128xf32>
      %902 = arith.mulf %880, %901 : vector<8x128xf32>
      %903 = arith.addf %900, %902 : vector<8x128xf32>
      %904 = vector.broadcast %5 : f32 to vector<8x128xf32>
      %905 = arith.mulf %883, %904 : vector<8x128xf32>
      %906 = arith.addf %903, %905 : vector<8x128xf32>
      %907 = vector.broadcast %6 : f32 to vector<8x128xf32>
      %908 = arith.mulf %886, %907 : vector<8x128xf32>
      %909 = arith.addf %906, %908 : vector<8x128xf32>
      %910 = vector.broadcast %7 : f32 to vector<8x128xf32>
      %911 = arith.mulf %889, %910 : vector<8x128xf32>
      %912 = arith.addf %909, %911 : vector<8x128xf32>
      %913 = vector.broadcast %32 : f32 to vector<8x128xf32>
      %914 = arith.addf %912, %913 : vector<8x128xf32>
      %cst_160 = arith.constant 0.000000e+00 : f32
      %915 = vector.broadcast %cst_160 : f32 to vector<8x128xf32>
      %916 = arith.maximumf %914, %915 : vector<8x128xf32>
      %917 = vector.broadcast %39 : f32 to vector<8x128xf32>
      %918 = arith.mulf %916, %917 : vector<8x128xf32>
      %919 = arith.addf %844, %918 : vector<8x128xf32>
      %920 = vector.broadcast %55 : f32 to vector<8x128xf32>
      %921 = arith.mulf %916, %920 : vector<8x128xf32>
      %922 = arith.addf %847, %921 : vector<8x128xf32>
      %923 = vector.broadcast %71 : f32 to vector<8x128xf32>
      %924 = arith.mulf %916, %923 : vector<8x128xf32>
      %925 = arith.addf %850, %924 : vector<8x128xf32>
      %926 = vector.broadcast %87 : f32 to vector<8x128xf32>
      %927 = arith.mulf %916, %926 : vector<8x128xf32>
      %928 = arith.addf %853, %927 : vector<8x128xf32>
      %929 = vector.broadcast %103 : f32 to vector<8x128xf32>
      %930 = arith.mulf %916, %929 : vector<8x128xf32>
      %931 = arith.addf %856, %930 : vector<8x128xf32>
      %932 = vector.broadcast %119 : f32 to vector<8x128xf32>
      %933 = arith.mulf %916, %932 : vector<8x128xf32>
      %934 = arith.addf %859, %933 : vector<8x128xf32>
      %935 = vector.broadcast %135 : f32 to vector<8x128xf32>
      %936 = arith.mulf %916, %935 : vector<8x128xf32>
      %937 = arith.addf %862, %936 : vector<8x128xf32>
      %938 = vector.broadcast %151 : f32 to vector<8x128xf32>
      %939 = arith.mulf %916, %938 : vector<8x128xf32>
      %940 = arith.addf %865, %939 : vector<8x128xf32>
      %941 = vector.broadcast %8 : f32 to vector<8x128xf32>
      %942 = arith.mulf %868, %941 : vector<8x128xf32>
      %943 = vector.broadcast %9 : f32 to vector<8x128xf32>
      %944 = arith.mulf %871, %943 : vector<8x128xf32>
      %945 = arith.addf %942, %944 : vector<8x128xf32>
      %946 = vector.broadcast %10 : f32 to vector<8x128xf32>
      %947 = arith.mulf %874, %946 : vector<8x128xf32>
      %948 = arith.addf %945, %947 : vector<8x128xf32>
      %949 = vector.broadcast %11 : f32 to vector<8x128xf32>
      %950 = arith.mulf %877, %949 : vector<8x128xf32>
      %951 = arith.addf %948, %950 : vector<8x128xf32>
      %952 = vector.broadcast %12 : f32 to vector<8x128xf32>
      %953 = arith.mulf %880, %952 : vector<8x128xf32>
      %954 = arith.addf %951, %953 : vector<8x128xf32>
      %955 = vector.broadcast %13 : f32 to vector<8x128xf32>
      %956 = arith.mulf %883, %955 : vector<8x128xf32>
      %957 = arith.addf %954, %956 : vector<8x128xf32>
      %958 = vector.broadcast %14 : f32 to vector<8x128xf32>
      %959 = arith.mulf %886, %958 : vector<8x128xf32>
      %960 = arith.addf %957, %959 : vector<8x128xf32>
      %961 = vector.broadcast %15 : f32 to vector<8x128xf32>
      %962 = arith.mulf %889, %961 : vector<8x128xf32>
      %963 = arith.addf %960, %962 : vector<8x128xf32>
      %964 = vector.broadcast %33 : f32 to vector<8x128xf32>
      %965 = arith.addf %963, %964 : vector<8x128xf32>
      %cst_161 = arith.constant 0.000000e+00 : f32
      %966 = vector.broadcast %cst_161 : f32 to vector<8x128xf32>
      %967 = arith.maximumf %965, %966 : vector<8x128xf32>
      %968 = vector.broadcast %43 : f32 to vector<8x128xf32>
      %969 = arith.mulf %967, %968 : vector<8x128xf32>
      %970 = arith.addf %919, %969 : vector<8x128xf32>
      %971 = vector.broadcast %59 : f32 to vector<8x128xf32>
      %972 = arith.mulf %967, %971 : vector<8x128xf32>
      %973 = arith.addf %922, %972 : vector<8x128xf32>
      %974 = vector.broadcast %75 : f32 to vector<8x128xf32>
      %975 = arith.mulf %967, %974 : vector<8x128xf32>
      %976 = arith.addf %925, %975 : vector<8x128xf32>
      %977 = vector.broadcast %91 : f32 to vector<8x128xf32>
      %978 = arith.mulf %967, %977 : vector<8x128xf32>
      %979 = arith.addf %928, %978 : vector<8x128xf32>
      %980 = vector.broadcast %107 : f32 to vector<8x128xf32>
      %981 = arith.mulf %967, %980 : vector<8x128xf32>
      %982 = arith.addf %931, %981 : vector<8x128xf32>
      %983 = vector.broadcast %123 : f32 to vector<8x128xf32>
      %984 = arith.mulf %967, %983 : vector<8x128xf32>
      %985 = arith.addf %934, %984 : vector<8x128xf32>
      %986 = vector.broadcast %139 : f32 to vector<8x128xf32>
      %987 = arith.mulf %967, %986 : vector<8x128xf32>
      %988 = arith.addf %937, %987 : vector<8x128xf32>
      %989 = vector.broadcast %155 : f32 to vector<8x128xf32>
      %990 = arith.mulf %967, %989 : vector<8x128xf32>
      %991 = arith.addf %940, %990 : vector<8x128xf32>
      %992 = vector.broadcast %16 : f32 to vector<8x128xf32>
      %993 = arith.mulf %868, %992 : vector<8x128xf32>
      %994 = vector.broadcast %17 : f32 to vector<8x128xf32>
      %995 = arith.mulf %871, %994 : vector<8x128xf32>
      %996 = arith.addf %993, %995 : vector<8x128xf32>
      %997 = vector.broadcast %18 : f32 to vector<8x128xf32>
      %998 = arith.mulf %874, %997 : vector<8x128xf32>
      %999 = arith.addf %996, %998 : vector<8x128xf32>
      %1000 = vector.broadcast %19 : f32 to vector<8x128xf32>
      %1001 = arith.mulf %877, %1000 : vector<8x128xf32>
      %1002 = arith.addf %999, %1001 : vector<8x128xf32>
      %1003 = vector.broadcast %20 : f32 to vector<8x128xf32>
      %1004 = arith.mulf %880, %1003 : vector<8x128xf32>
      %1005 = arith.addf %1002, %1004 : vector<8x128xf32>
      %1006 = vector.broadcast %21 : f32 to vector<8x128xf32>
      %1007 = arith.mulf %883, %1006 : vector<8x128xf32>
      %1008 = arith.addf %1005, %1007 : vector<8x128xf32>
      %1009 = vector.broadcast %22 : f32 to vector<8x128xf32>
      %1010 = arith.mulf %886, %1009 : vector<8x128xf32>
      %1011 = arith.addf %1008, %1010 : vector<8x128xf32>
      %1012 = vector.broadcast %23 : f32 to vector<8x128xf32>
      %1013 = arith.mulf %889, %1012 : vector<8x128xf32>
      %1014 = arith.addf %1011, %1013 : vector<8x128xf32>
      %1015 = vector.broadcast %34 : f32 to vector<8x128xf32>
      %1016 = arith.addf %1014, %1015 : vector<8x128xf32>
      %cst_162 = arith.constant 0.000000e+00 : f32
      %1017 = vector.broadcast %cst_162 : f32 to vector<8x128xf32>
      %1018 = arith.maximumf %1016, %1017 : vector<8x128xf32>
      %1019 = vector.broadcast %47 : f32 to vector<8x128xf32>
      %1020 = arith.mulf %1018, %1019 : vector<8x128xf32>
      %1021 = arith.addf %970, %1020 : vector<8x128xf32>
      %1022 = vector.broadcast %63 : f32 to vector<8x128xf32>
      %1023 = arith.mulf %1018, %1022 : vector<8x128xf32>
      %1024 = arith.addf %973, %1023 : vector<8x128xf32>
      %1025 = vector.broadcast %79 : f32 to vector<8x128xf32>
      %1026 = arith.mulf %1018, %1025 : vector<8x128xf32>
      %1027 = arith.addf %976, %1026 : vector<8x128xf32>
      %1028 = vector.broadcast %95 : f32 to vector<8x128xf32>
      %1029 = arith.mulf %1018, %1028 : vector<8x128xf32>
      %1030 = arith.addf %979, %1029 : vector<8x128xf32>
      %1031 = vector.broadcast %111 : f32 to vector<8x128xf32>
      %1032 = arith.mulf %1018, %1031 : vector<8x128xf32>
      %1033 = arith.addf %982, %1032 : vector<8x128xf32>
      %1034 = vector.broadcast %127 : f32 to vector<8x128xf32>
      %1035 = arith.mulf %1018, %1034 : vector<8x128xf32>
      %1036 = arith.addf %985, %1035 : vector<8x128xf32>
      %1037 = vector.broadcast %143 : f32 to vector<8x128xf32>
      %1038 = arith.mulf %1018, %1037 : vector<8x128xf32>
      %1039 = arith.addf %988, %1038 : vector<8x128xf32>
      %1040 = vector.broadcast %159 : f32 to vector<8x128xf32>
      %1041 = arith.mulf %1018, %1040 : vector<8x128xf32>
      %1042 = arith.addf %991, %1041 : vector<8x128xf32>
      %1043 = vector.broadcast %24 : f32 to vector<8x128xf32>
      %1044 = arith.mulf %868, %1043 : vector<8x128xf32>
      %1045 = vector.broadcast %25 : f32 to vector<8x128xf32>
      %1046 = arith.mulf %871, %1045 : vector<8x128xf32>
      %1047 = arith.addf %1044, %1046 : vector<8x128xf32>
      %1048 = vector.broadcast %26 : f32 to vector<8x128xf32>
      %1049 = arith.mulf %874, %1048 : vector<8x128xf32>
      %1050 = arith.addf %1047, %1049 : vector<8x128xf32>
      %1051 = vector.broadcast %27 : f32 to vector<8x128xf32>
      %1052 = arith.mulf %877, %1051 : vector<8x128xf32>
      %1053 = arith.addf %1050, %1052 : vector<8x128xf32>
      %1054 = vector.broadcast %28 : f32 to vector<8x128xf32>
      %1055 = arith.mulf %880, %1054 : vector<8x128xf32>
      %1056 = arith.addf %1053, %1055 : vector<8x128xf32>
      %1057 = vector.broadcast %29 : f32 to vector<8x128xf32>
      %1058 = arith.mulf %883, %1057 : vector<8x128xf32>
      %1059 = arith.addf %1056, %1058 : vector<8x128xf32>
      %1060 = vector.broadcast %30 : f32 to vector<8x128xf32>
      %1061 = arith.mulf %886, %1060 : vector<8x128xf32>
      %1062 = arith.addf %1059, %1061 : vector<8x128xf32>
      %1063 = vector.broadcast %31 : f32 to vector<8x128xf32>
      %1064 = arith.mulf %889, %1063 : vector<8x128xf32>
      %1065 = arith.addf %1062, %1064 : vector<8x128xf32>
      %1066 = vector.broadcast %35 : f32 to vector<8x128xf32>
      %1067 = arith.addf %1065, %1066 : vector<8x128xf32>
      %cst_163 = arith.constant 0.000000e+00 : f32
      %1068 = vector.broadcast %cst_163 : f32 to vector<8x128xf32>
      %1069 = arith.maximumf %1067, %1068 : vector<8x128xf32>
      %1070 = vector.broadcast %51 : f32 to vector<8x128xf32>
      %1071 = arith.mulf %1069, %1070 : vector<8x128xf32>
      %1072 = arith.addf %1021, %1071 : vector<8x128xf32>
      %1073 = vector.broadcast %67 : f32 to vector<8x128xf32>
      %1074 = arith.mulf %1069, %1073 : vector<8x128xf32>
      %1075 = arith.addf %1024, %1074 : vector<8x128xf32>
      %1076 = vector.broadcast %83 : f32 to vector<8x128xf32>
      %1077 = arith.mulf %1069, %1076 : vector<8x128xf32>
      %1078 = arith.addf %1027, %1077 : vector<8x128xf32>
      %1079 = vector.broadcast %99 : f32 to vector<8x128xf32>
      %1080 = arith.mulf %1069, %1079 : vector<8x128xf32>
      %1081 = arith.addf %1030, %1080 : vector<8x128xf32>
      %1082 = vector.broadcast %115 : f32 to vector<8x128xf32>
      %1083 = arith.mulf %1069, %1082 : vector<8x128xf32>
      %1084 = arith.addf %1033, %1083 : vector<8x128xf32>
      %1085 = vector.broadcast %131 : f32 to vector<8x128xf32>
      %1086 = arith.mulf %1069, %1085 : vector<8x128xf32>
      %1087 = arith.addf %1036, %1086 : vector<8x128xf32>
      %1088 = vector.broadcast %147 : f32 to vector<8x128xf32>
      %1089 = arith.mulf %1069, %1088 : vector<8x128xf32>
      %1090 = arith.addf %1039, %1089 : vector<8x128xf32>
      %1091 = vector.broadcast %163 : f32 to vector<8x128xf32>
      %1092 = arith.mulf %1069, %1091 : vector<8x128xf32>
      %1093 = arith.addf %1042, %1092 : vector<8x128xf32>
      %1094 = vector.broadcast %164 : f32 to vector<8x128xf32>
      %1095 = arith.addf %1072, %1094 : vector<8x128xf32>
      %cst_164 = arith.constant 0.000000e+00 : f32
      %1096 = vector.broadcast %cst_164 : f32 to vector<8x128xf32>
      %1097 = arith.maximumf %1095, %1096 : vector<8x128xf32>
      %c0_165 = arith.constant 0 : index
      %1098 = arith.index_cast %189 : i32 to index
      %c0_166 = arith.constant 0 : index
      %1099 = vector.load %arg7[%c0_165, %1098, %c0_166] : memref<8x400x128xf32, #tpu.memory_space<vmem>>, vector<1x8x128xf32>
      %1100 = vector.shape_cast %1099 : vector<1x8x128xf32> to vector<8x128xf32>
      %1101 = arith.mulf %1097, %1100 : vector<8x128xf32>
      %1102 = arith.addf %arg10, %1101 : vector<8x128xf32>
      %1103 = vector.broadcast %165 : f32 to vector<8x128xf32>
      %1104 = arith.addf %1075, %1103 : vector<8x128xf32>
      %cst_167 = arith.constant 0.000000e+00 : f32
      %1105 = vector.broadcast %cst_167 : f32 to vector<8x128xf32>
      %1106 = arith.maximumf %1104, %1105 : vector<8x128xf32>
      %c1_168 = arith.constant 1 : index
      %1107 = arith.index_cast %189 : i32 to index
      %c0_169 = arith.constant 0 : index
      %1108 = vector.load %arg7[%c1_168, %1107, %c0_169] : memref<8x400x128xf32, #tpu.memory_space<vmem>>, vector<1x8x128xf32>
      %1109 = vector.shape_cast %1108 : vector<1x8x128xf32> to vector<8x128xf32>
      %1110 = arith.mulf %1106, %1109 : vector<8x128xf32>
      %1111 = arith.addf %1102, %1110 : vector<8x128xf32>
      %1112 = vector.broadcast %166 : f32 to vector<8x128xf32>
      %1113 = arith.addf %1078, %1112 : vector<8x128xf32>
      %cst_170 = arith.constant 0.000000e+00 : f32
      %1114 = vector.broadcast %cst_170 : f32 to vector<8x128xf32>
      %1115 = arith.maximumf %1113, %1114 : vector<8x128xf32>
      %c2_171 = arith.constant 2 : index
      %1116 = arith.index_cast %189 : i32 to index
      %c0_172 = arith.constant 0 : index
      %1117 = vector.load %arg7[%c2_171, %1116, %c0_172] : memref<8x400x128xf32, #tpu.memory_space<vmem>>, vector<1x8x128xf32>
      %1118 = vector.shape_cast %1117 : vector<1x8x128xf32> to vector<8x128xf32>
      %1119 = arith.mulf %1115, %1118 : vector<8x128xf32>
      %1120 = arith.addf %1111, %1119 : vector<8x128xf32>
      %1121 = vector.broadcast %167 : f32 to vector<8x128xf32>
      %1122 = arith.addf %1081, %1121 : vector<8x128xf32>
      %cst_173 = arith.constant 0.000000e+00 : f32
      %1123 = vector.broadcast %cst_173 : f32 to vector<8x128xf32>
      %1124 = arith.maximumf %1122, %1123 : vector<8x128xf32>
      %c3_174 = arith.constant 3 : index
      %1125 = arith.index_cast %189 : i32 to index
      %c0_175 = arith.constant 0 : index
      %1126 = vector.load %arg7[%c3_174, %1125, %c0_175] : memref<8x400x128xf32, #tpu.memory_space<vmem>>, vector<1x8x128xf32>
      %1127 = vector.shape_cast %1126 : vector<1x8x128xf32> to vector<8x128xf32>
      %1128 = arith.mulf %1124, %1127 : vector<8x128xf32>
      %1129 = arith.addf %1120, %1128 : vector<8x128xf32>
      %1130 = vector.broadcast %168 : f32 to vector<8x128xf32>
      %1131 = arith.addf %1084, %1130 : vector<8x128xf32>
      %cst_176 = arith.constant 0.000000e+00 : f32
      %1132 = vector.broadcast %cst_176 : f32 to vector<8x128xf32>
      %1133 = arith.maximumf %1131, %1132 : vector<8x128xf32>
      %c4_177 = arith.constant 4 : index
      %1134 = arith.index_cast %189 : i32 to index
      %c0_178 = arith.constant 0 : index
      %1135 = vector.load %arg7[%c4_177, %1134, %c0_178] : memref<8x400x128xf32, #tpu.memory_space<vmem>>, vector<1x8x128xf32>
      %1136 = vector.shape_cast %1135 : vector<1x8x128xf32> to vector<8x128xf32>
      %1137 = arith.mulf %1133, %1136 : vector<8x128xf32>
      %1138 = arith.addf %1129, %1137 : vector<8x128xf32>
      %1139 = vector.broadcast %169 : f32 to vector<8x128xf32>
      %1140 = arith.addf %1087, %1139 : vector<8x128xf32>
      %cst_179 = arith.constant 0.000000e+00 : f32
      %1141 = vector.broadcast %cst_179 : f32 to vector<8x128xf32>
      %1142 = arith.maximumf %1140, %1141 : vector<8x128xf32>
      %c5_180 = arith.constant 5 : index
      %1143 = arith.index_cast %189 : i32 to index
      %c0_181 = arith.constant 0 : index
      %1144 = vector.load %arg7[%c5_180, %1143, %c0_181] : memref<8x400x128xf32, #tpu.memory_space<vmem>>, vector<1x8x128xf32>
      %1145 = vector.shape_cast %1144 : vector<1x8x128xf32> to vector<8x128xf32>
      %1146 = arith.mulf %1142, %1145 : vector<8x128xf32>
      %1147 = arith.addf %1138, %1146 : vector<8x128xf32>
      %1148 = vector.broadcast %170 : f32 to vector<8x128xf32>
      %1149 = arith.addf %1090, %1148 : vector<8x128xf32>
      %cst_182 = arith.constant 0.000000e+00 : f32
      %1150 = vector.broadcast %cst_182 : f32 to vector<8x128xf32>
      %1151 = arith.maximumf %1149, %1150 : vector<8x128xf32>
      %c6_183 = arith.constant 6 : index
      %1152 = arith.index_cast %189 : i32 to index
      %c0_184 = arith.constant 0 : index
      %1153 = vector.load %arg7[%c6_183, %1152, %c0_184] : memref<8x400x128xf32, #tpu.memory_space<vmem>>, vector<1x8x128xf32>
      %1154 = vector.shape_cast %1153 : vector<1x8x128xf32> to vector<8x128xf32>
      %1155 = arith.mulf %1151, %1154 : vector<8x128xf32>
      %1156 = arith.addf %1147, %1155 : vector<8x128xf32>
      %1157 = vector.broadcast %171 : f32 to vector<8x128xf32>
      %1158 = arith.addf %1093, %1157 : vector<8x128xf32>
      %cst_185 = arith.constant 0.000000e+00 : f32
      %1159 = vector.broadcast %cst_185 : f32 to vector<8x128xf32>
      %1160 = arith.maximumf %1158, %1159 : vector<8x128xf32>
      %c7_186 = arith.constant 7 : index
      %1161 = arith.index_cast %189 : i32 to index
      %c0_187 = arith.constant 0 : index
      %1162 = vector.load %arg7[%c7_186, %1161, %c0_187] : memref<8x400x128xf32, #tpu.memory_space<vmem>>, vector<1x8x128xf32>
      %1163 = vector.shape_cast %1162 : vector<1x8x128xf32> to vector<8x128xf32>
      %1164 = arith.mulf %1160, %1163 : vector<8x128xf32>
      %1165 = arith.addf %1156, %1164 : vector<8x128xf32>
      scf.yield %1165 : vector<8x128xf32>
    }
    %c50_i32_44 = arith.constant 50 : i32
    %cst_45 = arith.constant dense<0.000000e+00> : vector<128xf32>
    %175 = vector.multi_reduction <add>, %174, %cst_45 [0] : vector<8x128xf32> to vector<128xf32>
    %176 = vector.shape_cast %175 : vector<128xf32> to vector<1x128xf32>
    %c0_46 = arith.constant 0 : index
    %177 = memref.load %arg5[%c0_46] : memref<1xf32, #tpu.memory_space<smem>>
    %178 = vector.broadcast %177 : f32 to vector<1x128xf32>
    %179 = arith.addf %176, %178 : vector<1x128xf32>
    %cst_47 = arith.constant 0.000000e+00 : f32
    %180 = vector.broadcast %cst_47 : f32 to vector<1x128xf32>
    %181 = arith.subf %180, %179 : vector<1x128xf32>
    %182 = math.exp %181 : vector<1x128xf32>
    %cst_48 = arith.constant 1.000000e+00 : f32
    %183 = vector.broadcast %cst_48 : f32 to vector<1x128xf32>
    %184 = arith.addf %183, %182 : vector<1x128xf32>
    %cst_49 = arith.constant 1.000000e+00 : f32
    %185 = vector.broadcast %cst_49 : f32 to vector<1x128xf32>
    %186 = arith.divf %185, %184 : vector<1x128xf32>
    %c0_50 = arith.constant 0 : index
    %c0_51 = arith.constant 0 : index
    %187 = vector.load %arg8[%c0_50, %c0_51] : memref<1x128xf32, #tpu.memory_space<vmem>>, vector<1x128xf32>
    tpu.vector_store %arg8[%c0_50, %c0_51], %186 {strides = array<i32>} : memref<1x128xf32, #tpu.memory_space<vmem>>, vector<1x128xf32>,
    return
  }
  func.func @transform_0(%arg0: i32) -> i32 {
    %c0_i32 = arith.constant 0 : i32
    %c0_i32_0 = arith.constant 0 : i32
    return %c0_i32 : i32
  }
  func.func @transform_1(%arg0: i32) -> i32 {
    %c0_i32 = arith.constant 0 : i32
    %c0_i32_0 = arith.constant 0 : i32
    return %c0_i32 : i32
  }
  func.func @transform_2(%arg0: i32) -> i32 {
    %c0_i32 = arith.constant 0 : i32
    %c0_i32_0 = arith.constant 0 : i32
    return %c0_i32 : i32
  }
  func.func @transform_3(%arg0: i32) -> i32 {
    %c0_i32 = arith.constant 0 : i32
    %c0_i32_0 = arith.constant 0 : i32
    return %c0_i32 : i32
  }
  func.func @transform_4(%arg0: i32) -> i32 {
    %c0_i32 = arith.constant 0 : i32
    %c0_i32_0 = arith.constant 0 : i32
    return %c0_i32 : i32
  }
  func.func @transform_5(%arg0: i32) -> (i32, i32, i32, i32) {
    %c0_i32 = arith.constant 0 : i32
    %c0_i32_0 = arith.constant 0 : i32
    %c0_i32_1 = arith.constant 0 : i32
    %c0_i32_2 = arith.constant 0 : i32
    return %arg0, %c0_i32, %c0_i32_0, %c0_i32_1 : i32, i32, i32, i32
  }
  func.func @transform_6(%arg0: i32) -> (i32, i32, i32) {
    %c0_i32 = arith.constant 0 : i32
    %c0_i32_0 = arith.constant 0 : i32
    %c0_i32_1 = arith.constant 0 : i32
    %c0_i32_2 = arith.constant 0 : i32
    return %c0_i32, %c0_i32_0, %c0_i32_1 : i32, i32, i32
  }
  func.func @transform_7(%arg0: i32) -> (i32, i32) {
    %c0_i32 = arith.constant 0 : i32
    %c0_i32_0 = arith.constant 0 : i32
    return %c0_i32, %arg0 : i32, i32
  }
}

</mosaic_0001>

<llo_original>
// kernel: policy_forward.1
$region0: #{policy_forward.1}
  #allocation0 [shape = 'u32[]', space=smem, size = 0x4, offset = 0x4, fixed_abs, tag = 'smem constant byte address 0x4 - core index']
  #allocation1 [shape = 'u32[72,128]{1,0:T(1,128)}', space=vmem, size = 0x9000, scoped, tag = 'internal scratch']
  #allocation2 [shape = 'f32[1]{0:T(128)S(6)}', space=smem, size = 0x200, scoped, tag = 'scoped memory for policy_forward.1']
  %s0 = inlined_call_operand.vmem [shape: f32[32], index: 0, kind: input, shape index: {}]
  %s1 = inlined_call_operand.vmem [shape: f32[4], index: 1, kind: input, shape index: {}]
  %s2 = inlined_call_operand.vmem [shape: f32[128], index: 2, kind: input, shape index: {}]
  %s3 = inlined_call_operand.vmem [shape: f32[8], index: 3, kind: input, shape index: {}]
  %s4 = inlined_call_operand.<no memory space> [shape: f32[1], index: 4, kind: input, shape index: {}]
  %s5 = inlined_call_operand.vmem [shape: f32[1,32,400,128], index: 5, kind: input, shape index: {}]
  %s6 = inlined_call_operand.vmem [shape: f32[8,400,128], index: 6, kind: input, shape index: {}]
  %s7 = inlined_call_operand.vmem [shape: f32[1,128], index: 7, kind: output, shape index: {}]
  %s8 = sld [smem:[#allocation0]]
  $region61: #{policy_forward.1} parent=0
    _
  %s10 = ssub.s32 1, %s8
  %s11 = scalar_select 0, %s10, %s8
  %12 = sst [smem:[#allocation2]] %s4
  $region1: #{policy_forward.1} parent=0
    #allocation3 [shape = 'u8[512]{0}', space=smem, size = 0x200, scoped, tag = 'input window, operand 0, single buffered']
    #allocation4 [shape = 's32[1]{0}', space=sflag, size = 0x4, scoped, tag = 'scoped memory for policy_forward.1']
    #allocation5 [shape = 'u8[512]{0}', space=smem, size = 0x200, scoped, tag = 'input window, operand 1, single buffered']
    #allocation6 [shape = 's32[1]{0}', space=sflag, size = 0x4, scoped, tag = 'scoped memory for policy_forward.1']
    #allocation7 [shape = 'u8[512]{0}', space=smem, size = 0x200, scoped, tag = 'input window, operand 2, single buffered']
    #allocation8 [shape = 'u8[512]{0}', space=smem, size = 0x200, scoped, tag = 'input window, operand 3, single buffered']
    #allocation9 [shape = 's32[1]{0}', space=sflag, size = 0x4, scoped, tag = 'scoped memory for policy_forward.1']
    %13 = vsyncpa [#allocation4], 0
    %14 = vsyncpa [#allocation6], 0
    %15 = vsyncpa [#allocation9], 0
    // Predicated region
    $region2: #{policy_forward.1} parent=1 // pred_check
      _
    $region3: #{policy_forward.1} parent=1 // pred_check_branch
      %17 = sbr.rel (0) target = $region5
    $region4: #{policy_forward.1} parent=1 // pred_region
      %19 = vsyncadd [#allocation4], 0
      %s21 = sshll.u32 %s0, 4
      %s22 = int_to_ptr.vmem [resolvable:$true] %s21
      %24 = dma.vmem_to_smem %s22, 16, [#allocation3], [#allocation4]
    $region5: #{policy_forward.1} parent=1 // pred_fallthru
      _
    // Predicated region
    $region6: #{policy_forward.1} parent=1 // pred_check
      _
    $region7: #{policy_forward.1} parent=1 // pred_check_branch
      %26 = sbr.rel (0) target = $region9
    $region8: #{policy_forward.1} parent=1 // pred_region
      %28 = vsyncadd [#allocation6], 0
      %s30 = sshll.u32 %s1, 4
      %s31 = int_to_ptr.vmem [resolvable:$true] %s30
      %33 = dma.vmem_to_smem %s31, 16, [#allocation5], [#allocation6]
    $region9: #{policy_forward.1} parent=1 // pred_fallthru
      _
    // Predicated region
    $region10: #{policy_forward.1} parent=1 // pred_check
      _
    $region11: #{policy_forward.1} parent=1 // pred_check_branch
      %35 = sbr.rel (0) target = $region13
    $region12: #{policy_forward.1} parent=1 // pred_region
      %37 = vsyncadd [#allocation6], 0
      %s39 = sshll.u32 %s2, 4
      %s40 = int_to_ptr.vmem [resolvable:$true] %s39
      %42 = dma.vmem_to_smem %s40, 16, [#allocation7], [#allocation6]
    $region13: #{policy_forward.1} parent=1 // pred_fallthru
      _
    // Predicated region
    $region14: #{policy_forward.1} parent=1 // pred_check
      _
    $region15: #{policy_forward.1} parent=1 // pred_check_branch
      %44 = sbr.rel (0) target = $region17
    $region16: #{policy_forward.1} parent=1 // pred_region
      %46 = vsyncadd [#allocation9], 0
      %s48 = sshll.u32 %s3, 4
      %s49 = int_to_ptr.vmem [resolvable:$true] %s48
      %51 = dma.vmem_to_smem %s49, 16, [#allocation8], [#allocation9]
    $region17: #{policy_forward.1} parent=1 // pred_fallthru
      _
    // Predicated region
    $region18: #{policy_forward.1} parent=1 // pred_check
      _
    $region19: #{policy_forward.1} parent=1 // pred_check_branch
      %53 = sbr.rel (0) target = $region21
    $region20: #{policy_forward.1} parent=1 // pred_region
      _
    $region21: #{policy_forward.1} parent=1 // pred_fallthru
      _
    // Predicated region
    $region22: #{policy_forward.1} parent=1 // pred_check
      _
    $region23: #{policy_forward.1} parent=1 // pred_check_branch
      %55 = sbr.rel (0) target = $region25
    $region24: #{policy_forward.1} parent=1 // pred_region
      _
    $region25: #{policy_forward.1} parent=1 // pred_fallthru
      _
    // Predicated region
    $region26: #{policy_forward.1} parent=1 // pred_check
      _
    $region27: #{policy_forward.1} parent=1 // pred_check_branch
      %57 = sbr.rel (0) target = $region29
    $region28: #{policy_forward.1} parent=1 // pred_region
      _
    $region29: #{policy_forward.1} parent=1 // pred_fallthru
      _
    // Predicated region
    $region30: #{policy_forward.1} parent=1 // pred_check
      _
    $region31: #{policy_forward.1} parent=1 // pred_check_branch
      %59 = sbr.rel (0) target = $region33
    $region32: #{policy_forward.1} parent=1 // pred_region
      %61 = dma.done [#allocation4], 16
    $region33: #{policy_forward.1} parent=1 // pred_fallthru
      _
    // Predicated region
    $region34: #{policy_forward.1} parent=1 // pred_check
      _
    $region35: #{policy_forward.1} parent=1 // pred_check_branch
      %63 = sbr.rel (0) target = $region37
    $region36: #{policy_forward.1} parent=1 // pred_region
      %65 = dma.done [#allocation6], 16
    $region37: #{policy_forward.1} parent=1 // pred_fallthru
      _
    // Predicated region
    $region38: #{policy_forward.1} parent=1 // pred_check
      _
    $region39: #{policy_forward.1} parent=1 // pred_check_branch
      %67 = sbr.rel (0) target = $region41
    $region40: #{policy_forward.1} parent=1 // pred_region
      %69 = dma.done [#allocation6], 16
    $region41: #{policy_forward.1} parent=1 // pred_fallthru
      _
    // Predicated region
    $region42: #{policy_forward.1} parent=1 // pred_check
      _
    $region43: #{policy_forward.1} parent=1 // pred_check_branch
      %71 = sbr.rel (0) target = $region45
    $region44: #{policy_forward.1} parent=1 // pred_region
      %73 = dma.done [#allocation9], 16
    $region45: #{policy_forward.1} parent=1 // pred_fallthru
      _
    %74 = sfence
    %s75 = sld [smem:[#allocation3]]
    %s76 = sld [smem:[#allocation3 + $0x1]]
    %s77 = sld [smem:[#allocation3 + $0x2]]
    %s78 = sld [smem:[#allocation3 + $0x3]]
    %s79 = sld [smem:[#allocation3 + $0x4]]
    %s80 = sld [smem:[#allocation3 + $0x5]]
    %s81 = sld [smem:[#allocation3 + $0x6]]
    %s82 = sld [smem:[#allocation3 + $0x7]]
    %s83 = sld [smem:[#allocation3 + $0x8]]
    %s84 = sld [smem:[#allocation3 + $0x9]]
    %s85 = sld [smem:[#allocation3 + $0xa]]
    %s86 = sld [smem:[#allocation3 + $0xb]]
    %s87 = sld [smem:[#allocation3 + $0xc]]
    %s88 = sld [smem:[#allocation3 + $0xd]]
    %s89 = sld [smem:[#allocation3 + $0xe]]
    %s90 = sld [smem:[#allocation3 + $0xf]]
    %s91 = sld [smem:[#allocation3 + $0x10]]
    %s92 = sld [smem:[#allocation3 + $0x11]]
    %s93 = sld [smem:[#allocation3 + $0x12]]
    %s94 = sld [smem:[#allocation3 + $0x13]]
    %s95 = sld [smem:[#allocation3 + $0x14]]
    %s96 = sld [smem:[#allocation3 + $0x15]]
    %s97 = sld [smem:[#allocation3 + $0x16]]
    %s98 = sld [smem:[#allocation3 + $0x17]]
    %s99 = sld [smem:[#allocation3 + $0x18]]
    %s100 = sld [smem:[#allocation3 + $0x19]]
    %s101 = sld [smem:[#allocation3 + $0x1a]]
    %s102 = sld [smem:[#allocation3 + $0x1b]]
    %s103 = sld [smem:[#allocation3 + $0x1c]]
    %s104 = sld [smem:[#allocation3 + $0x1d]]
    %s105 = sld [smem:[#allocation3 + $0x1e]]
    %s106 = sld [smem:[#allocation3 + $0x1f]]
    %s107 = sld [smem:[#allocation5]]
    %s108 = sld [smem:[#allocation5 + $0x1]]
    %s109 = sld [smem:[#allocation5 + $0x2]]
    %s110 = sld [smem:[#allocation5 + $0x3]]
    %s111 = sld [smem:[#allocation7]]
    %s112 = sld [smem:[#allocation7 + $0x1]]
    %s113 = sld [smem:[#allocation7 + $0x2]]
    %s114 = sld [smem:[#allocation7 + $0x3]]
    %s115 = sld [smem:[#allocation7 + $0x4]]
    %s116 = sld [smem:[#allocation7 + $0x5]]
    %s117 = sld [smem:[#allocation7 + $0x6]]
    %s118 = sld [smem:[#allocation7 + $0x7]]
    %s119 = sld [smem:[#allocation7 + $0x8]]
    %s120 = sld [smem:[#allocation7 + $0x9]]
    %s121 = sld [smem:[#allocation7 + $0xa]]
    %s122 = sld [smem:[#allocation7 + $0xb]]
    %s123 = sld [smem:[#allocation7 + $0xc]]
    %s124 = sld [smem:[#allocation7 + $0xd]]
    %s125 = sld [smem:[#allocation7 + $0xe]]
    %s126 = sld [smem:[#allocation7 + $0xf]]
    %s127 = sld [smem:[#allocation7 + $0x10]]
    %s128 = sld [smem:[#allocation7 + $0x11]]
    %s129 = sld [smem:[#allocation7 + $0x12]]
    %s130 = sld [smem:[#allocation7 + $0x13]]
    %s131 = sld [smem:[#allocation7 + $0x14]]
    %s132 = sld [smem:[#allocation7 + $0x15]]
    %s133 = sld [smem:[#allocation7 + $0x16]]
    %s134 = sld [smem:[#allocation7 + $0x17]]
    %s135 = sld [smem:[#allocation7 + $0x18]]
    %s136 = sld [smem:[#allocation7 + $0x19]]
    %s137 = sld [smem:[#allocation7 + $0x1a]]
    %s138 = sld [smem:[#allocation7 + $0x1b]]
    %s139 = sld [smem:[#allocation7 + $0x1c]]
    %s140 = sld [smem:[#allocation7 + $0x1d]]
    %s141 = sld [smem:[#allocation7 + $0x1e]]
    %s142 = sld [smem:[#allocation7 + $0x1f]]
    %s143 = sld [smem:[#allocation7 + $0x20]]
    %s144 = sld [smem:[#allocation7 + $0x21]]
    %s145 = sld [smem:[#allocation7 + $0x22]]
    %s146 = sld [smem:[#allocation7 + $0x23]]
    %s147 = sld [smem:[#allocation7 + $0x24]]
    %s148 = sld [smem:[#allocation7 + $0x25]]
    %s149 = sld [smem:[#allocation7 + $0x26]]
    %s150 = sld [smem:[#allocation7 + $0x27]]
    %s151 = sld [smem:[#allocation7 + $0x28]]
    %s152 = sld [smem:[#allocation7 + $0x29]]
    %s153 = sld [smem:[#allocation7 + $0x2a]]
    %s154 = sld [smem:[#allocation7 + $0x2b]]
    %s155 = sld [smem:[#allocation7 + $0x2c]]
    %s156 = sld [smem:[#allocation7 + $0x2d]]
    %s157 = sld [smem:[#allocation7 + $0x2e]]
    %s158 = sld [smem:[#allocation7 + $0x2f]]
    %s159 = sld [smem:[#allocation7 + $0x30]]
    %s160 = sld [smem:[#allocation7 + $0x31]]
    %s161 = sld [smem:[#allocation7 + $0x32]]
    %s162 = sld [smem:[#allocation7 + $0x33]]
    %s163 = sld [smem:[#allocation7 + $0x34]]
    %s164 = sld [smem:[#allocation7 + $0x35]]
    %s165 = sld [smem:[#allocation7 + $0x36]]
    %s166 = sld [smem:[#allocation7 + $0x37]]
    %s167 = sld [smem:[#allocation7 + $0x38]]
    %s168 = sld [smem:[#allocation7 + $0x39]]
    %s169 = sld [smem:[#allocation7 + $0x3a]]
    %s170 = sld [smem:[#allocation7 + $0x3b]]
    %s171 = sld [smem:[#allocation7 + $0x3c]]
    %s172 = sld [smem:[#allocation7 + $0x3d]]
    %s173 = sld [smem:[#allocation7 + $0x3e]]
    %s174 = sld [smem:[#allocation7 + $0x3f]]
    %s175 = sld [smem:[#allocation7 + $0x40]]
    %s176 = sld [smem:[#allocation7 + $0x41]]
    %s177 = sld [smem:[#allocation7 + $0x42]]
    %s178 = sld [smem:[#allocation7 + $0x43]]
    %s179 = sld [smem:[#allocation7 + $0x44]]
    %s180 = sld [smem:[#allocation7 + $0x45]]
    %s181 = sld [smem:[#allocation7 + $0x46]]
    %s182 = sld [smem:[#allocation7 + $0x47]]
    %s183 = sld [smem:[#allocation7 + $0x48]]
    %s184 = sld [smem:[#allocation7 + $0x49]]
    %s185 = sld [smem:[#allocation7 + $0x4a]]
    %s186 = sld [smem:[#allocation7 + $0x4b]]
    %s187 = sld [smem:[#allocation7 + $0x4c]]
    %s188 = sld [smem:[#allocation7 + $0x4d]]
    %s189 = sld [smem:[#allocation7 + $0x4e]]
    %s190 = sld [smem:[#allocation7 + $0x4f]]
    %s191 = sld [smem:[#allocation7 + $0x50]]
    %s192 = sld [smem:[#allocation7 + $0x51]]
    %s193 = sld [smem:[#allocation7 + $0x52]]
    %s194 = sld [smem:[#allocation7 + $0x53]]
    %s195 = sld [smem:[#allocation7 + $0x54]]
    %s196 = sld [smem:[#allocation7 + $0x55]]
    %s197 = sld [smem:[#allocation7 + $0x56]]
    %s198 = sld [smem:[#allocation7 + $0x57]]
    %s199 = sld [smem:[#allocation7 + $0x58]]
    %s200 = sld [smem:[#allocation7 + $0x59]]
    %s201 = sld [smem:[#allocation7 + $0x5a]]
    %s202 = sld [smem:[#allocation7 + $0x5b]]
    %s203 = sld [smem:[#allocation7 + $0x5c]]
    %s204 = sld [smem:[#allocation7 + $0x5d]]
    %s205 = sld [smem:[#allocation7 + $0x5e]]
    %s206 = sld [smem:[#allocation7 + $0x5f]]
    %s207 = sld [smem:[#allocation7 + $0x60]]
    %s208 = sld [smem:[#allocation7 + $0x61]]
    %s209 = sld [smem:[#allocation7 + $0x62]]
    %s210 = sld [smem:[#allocation7 + $0x63]]
    %s211 = sld [smem:[#allocation7 + $0x64]]
    %s212 = sld [smem:[#allocation7 + $0x65]]
    %s213 = sld [smem:[#allocation7 + $0x66]]
    %s214 = sld [smem:[#allocation7 + $0x67]]
    %s215 = sld [smem:[#allocation7 + $0x68]]
    %s216 = sld [smem:[#allocation7 + $0x69]]
    %s217 = sld [smem:[#allocation7 + $0x6a]]
    %s218 = sld [smem:[#allocation7 + $0x6b]]
    %s219 = sld [smem:[#allocation7 + $0x6c]]
    %s220 = sld [smem:[#allocation7 + $0x6d]]
    %s221 = sld [smem:[#allocation7 + $0x6e]]
    %s222 = sld [smem:[#allocation7 + $0x6f]]
    %s223 = sld [smem:[#allocation7 + $0x70]]
    %s224 = sld [smem:[#allocation7 + $0x71]]
    %s225 = sld [smem:[#allocation7 + $0x72]]
    %s226 = sld [smem:[#allocation7 + $0x73]]
    %s227 = sld [smem:[#allocation7 + $0x74]]
    %s228 = sld [smem:[#allocation7 + $0x75]]
    %s229 = sld [smem:[#allocation7 + $0x76]]
    %s230 = sld [smem:[#allocation7 + $0x77]]
    %s231 = sld [smem:[#allocation7 + $0x78]]
    %s232 = sld [smem:[#allocation7 + $0x79]]
    %s233 = sld [smem:[#allocation7 + $0x7a]]
    %s234 = sld [smem:[#allocation7 + $0x7b]]
    %s235 = sld [smem:[#allocation7 + $0x7c]]
    %s236 = sld [smem:[#allocation7 + $0x7d]]
    %s237 = sld [smem:[#allocation7 + $0x7e]]
    %s238 = sld [smem:[#allocation7 + $0x7f]]
    %s239 = sld [smem:[#allocation8]]
    %s240 = sld [smem:[#allocation8 + $0x1]]
    %s241 = sld [smem:[#allocation8 + $0x2]]
    %s242 = sld [smem:[#allocation8 + $0x3]]
    %s243 = sld [smem:[#allocation8 + $0x4]]
    %s244 = sld [smem:[#allocation8 + $0x5]]
    %s245 = sld [smem:[#allocation8 + $0x6]]
    %s246 = sld [smem:[#allocation8 + $0x7]]
    loop: start=0, step=1, limit=50
    $region46: #{policy_forward.1} parent=1 // loop_pre_header
      _
    $region47: #{policy_forward.1} parent=1 // loop_header
      %s248 = sphi 0, %s252
      %p249 = scmp.ge.s32.totalorder %s248, 50
      %v253 = vphi 0.0, %v1089
    $region48: #{policy_forward.1} parent=1 // loop_header_branch
      %251 = sbr.rel (%p249) target = $region52
    $region49: #{policy_forward.1} parent=1 // loop_body
      %s254 = smul.u32 %s248, 8
      %s255 = scalar_lea.vmem %s5, %s254
      %v256 = vld [vmem:[%s255] sm:$0xff]
      %s257 = sadd.s32 %s254, 400
      %s258 = scalar_lea.vmem %s5, %s257
      %v259 = vld [vmem:[%s258] sm:$0xff]
      %s260 = sadd.s32 %s254, 1600
      %s261 = scalar_lea.vmem %s5, %s260
      %v262 = vld [vmem:[%s261] sm:$0xff]
      %s263 = sadd.s32 %s254, 2000
      %s264 = scalar_lea.vmem %s5, %s263
      %v265 = vld [vmem:[%s264] sm:$0xff]
      %s266 = sadd.s32 %s254, 6400
      %s267 = scalar_lea.vmem %s5, %s266
      %v268 = vld [vmem:[%s267] sm:$0xff]
      %s269 = sadd.s32 %s254, 6800
      %s270 = scalar_lea.vmem %s5, %s269
      %v271 = vld [vmem:[%s270] sm:$0xff]
      %s272 = sadd.s32 %s254, 8000
      %s273 = scalar_lea.vmem %s5, %s272
      %v274 = vld [vmem:[%s273] sm:$0xff]
      %s275 = sadd.s32 %s254, 8400
      %s276 = scalar_lea.vmem %s5, %s275
      %v277 = vld [vmem:[%s276] sm:$0xff]
      %v278 = vstv %s75
      %v279 = vmul.f32 %v256, %v278
      %v280 = vstv %s76
      %v281 = vmul.f32 %v259, %v280
      %v282 = vadd.f32 %v279, %v281
      %v283 = vstv %s77
      %v284 = vmul.f32 %v262, %v283
      %v285 = vadd.f32 %v282, %v284
      %v286 = vstv %s78
      %v287 = vmul.f32 %v265, %v286
      %v288 = vadd.f32 %v285, %v287
      %v289 = vstv %s79
      %v290 = vmul.f32 %v268, %v289
      %v291 = vadd.f32 %v288, %v290
      %v292 = vstv %s80
      %v293 = vmul.f32 %v271, %v292
      %v294 = vadd.f32 %v291, %v293
      %v295 = vstv %s81
      %v296 = vmul.f32 %v274, %v295
      %v297 = vadd.f32 %v294, %v296
      %v298 = vstv %s82
      %v299 = vmul.f32 %v277, %v298
      %v300 = vadd.f32 %v297, %v299
      %v301 = vstv %s107
      %v302 = vadd.f32 %v300, %v301
      %v303 = vmax.f32 %v302, 0.0
      %v304 = vstv %s111
      %v305 = vmul.f32 %v303, %v304
      %v306 = vstv %s127
      %v307 = vmul.f32 %v303, %v306
      %v308 = vstv %s143
      %v309 = vmul.f32 %v303, %v308
      %v310 = vstv %s159
      %v311 = vmul.f32 %v303, %v310
      %v312 = vstv %s175
      %v313 = vmul.f32 %v303, %v312
      %v314 = vstv %s191
      %v315 = vmul.f32 %v303, %v314
      %v316 = vstv %s207
      %v317 = vmul.f32 %v303, %v316
      %v318 = vstv %s223
      %v319 = vmul.f32 %v303, %v318
      %v320 = vstv %s83
      %v321 = vmul.f32 %v256, %v320
      %v322 = vstv %s84
      %v323 = vmul.f32 %v259, %v322
      %v324 = vadd.f32 %v321, %v323
      %v325 = vstv %s85
      %v326 = vmul.f32 %v262, %v325
      %v327 = vadd.f32 %v324, %v326
      %v328 = vstv %s86
      %v329 = vmul.f32 %v265, %v328
      %v330 = vadd.f32 %v327, %v329
      %v331 = vstv %s87
      %v332 = vmul.f32 %v268, %v331
      %v333 = vadd.f32 %v330, %v332
      %v334 = vstv %s88
      %v335 = vmul.f32 %v271, %v334
      %v336 = vadd.f32 %v333, %v335
      %v337 = vstv %s89
      %v338 = vmul.f32 %v274, %v337
      %v339 = vadd.f32 %v336, %v338
      %v340 = vstv %s90
      %v341 = vmul.f32 %v277, %v340
      %v342 = vadd.f32 %v339, %v341
      %v343 = vstv %s108
      %v344 = vadd.f32 %v342, %v343
      %v345 = vmax.f32 %v344, 0.0
      %v346 = vstv %s115
      %v347 = vmul.f32 %v345, %v346
      %v348 = vadd.f32 %v305, %v347
      %v349 = vstv %s131
      %v350 = vmul.f32 %v345, %v349
      %v351 = vadd.f32 %v307, %v350
      %v352 = vstv %s147
      %v353 = vmul.f32 %v345, %v352
      %v354 = vadd.f32 %v309, %v353
      %v355 = vstv %s163
      %v356 = vmul.f32 %v345, %v355
      %v357 = vadd.f32 %v311, %v356
      %v358 = vstv %s179
      %v359 = vmul.f32 %v345, %v358
      %v360 = vadd.f32 %v313, %v359
      %v361 = vstv %s195
      %v362 = vmul.f32 %v345, %v361
      %v363 = vadd.f32 %v315, %v362
      %v364 = vstv %s211
      %v365 = vmul.f32 %v345, %v364
      %v366 = vadd.f32 %v317, %v365
      %v367 = vstv %s227
      %v368 = vmul.f32 %v345, %v367
      %v369 = vadd.f32 %v319, %v368
      %v370 = vstv %s91
      %v371 = vmul.f32 %v256, %v370
      %v372 = vstv %s92
      %v373 = vmul.f32 %v259, %v372
      %v374 = vadd.f32 %v371, %v373
      %v375 = vstv %s93
      %v376 = vmul.f32 %v262, %v375
      %v377 = vadd.f32 %v374, %v376
      %v378 = vstv %s94
      %v379 = vmul.f32 %v265, %v378
      %v380 = vadd.f32 %v377, %v379
      %v381 = vstv %s95
      %v382 = vmul.f32 %v268, %v381
      %v383 = vadd.f32 %v380, %v382
      %v384 = vstv %s96
      %v385 = vmul.f32 %v271, %v384
      %v386 = vadd.f32 %v383, %v385
      %v387 = vstv %s97
      %v388 = vmul.f32 %v274, %v387
      %v389 = vadd.f32 %v386, %v388
      %v390 = vstv %s98
      %v391 = vmul.f32 %v277, %v390
      %v392 = vadd.f32 %v389, %v391
      %v393 = vstv %s109
      %v394 = vadd.f32 %v392, %v393
      %v395 = vmax.f32 %v394, 0.0
      %v396 = vstv %s119
      %v397 = vmul.f32 %v395, %v396
      %v398 = vadd.f32 %v348, %v397
      %v399 = vstv %s135
      %v400 = vmul.f32 %v395, %v399
      %v401 = vadd.f32 %v351, %v400
      %v402 = vstv %s151
      %v403 = vmul.f32 %v395, %v402
      %v404 = vadd.f32 %v354, %v403
      %v405 = vstv %s167
      %v406 = vmul.f32 %v395, %v405
      %v407 = vadd.f32 %v357, %v406
      %v408 = vstv %s183
      %v409 = vmul.f32 %v395, %v408
      %v410 = vadd.f32 %v360, %v409
      %v411 = vstv %s199
      %v412 = vmul.f32 %v395, %v411
      %v413 = vadd.f32 %v363, %v412
      %v414 = vstv %s215
      %v415 = vmul.f32 %v395, %v414
      %v416 = vadd.f32 %v366, %v415
      %v417 = vstv %s231
      %v418 = vmul.f32 %v395, %v417
      %v419 = vadd.f32 %v369, %v418
      %v420 = vstv %s99
      %v421 = vmul.f32 %v256, %v420
      %v422 = vstv %s100
      %v423 = vmul.f32 %v259, %v422
      %v424 = vadd.f32 %v421, %v423
      %v425 = vstv %s101
      %v426 = vmul.f32 %v262, %v425
      %v427 = vadd.f32 %v424, %v426
      %v428 = vstv %s102
      %v429 = vmul.f32 %v265, %v428
      %v430 = vadd.f32 %v427, %v429
      %v431 = vstv %s103
      %v432 = vmul.f32 %v268, %v431
      %v433 = vadd.f32 %v430, %v432
      %v434 = vstv %s104
      %v435 = vmul.f32 %v271, %v434
      %v436 = vadd.f32 %v433, %v435
      %v437 = vstv %s105
      %v438 = vmul.f32 %v274, %v437
      %v439 = vadd.f32 %v436, %v438
      %v440 = vstv %s106
      %v441 = vmul.f32 %v277, %v440
      %v442 = vadd.f32 %v439, %v441
      %v443 = vstv %s110
      %v444 = vadd.f32 %v442, %v443
      %v445 = vmax.f32 %v444, 0.0
      %v446 = vstv %s123
      %v447 = vmul.f32 %v445, %v446
      %v448 = vadd.f32 %v398, %v447
      %v449 = vstv %s139
      %v450 = vmul.f32 %v445, %v449
      %v451 = vadd.f32 %v401, %v450
      %v452 = vstv %s155
      %v453 = vmul.f32 %v445, %v452
      %v454 = vadd.f32 %v404, %v453
      %v455 = vstv %s171
      %v456 = vmul.f32 %v445, %v455
      %v457 = vadd.f32 %v407, %v456
      %v458 = vstv %s187
      %v459 = vmul.f32 %v445, %v458
      %v460 = vadd.f32 %v410, %v459
      %v461 = vstv %s203
      %v462 = vmul.f32 %v445, %v461
      %v463 = vadd.f32 %v413, %v462
      %v464 = vstv %s219
      %v465 = vmul.f32 %v445, %v464
      %v466 = vadd.f32 %v416, %v465
      %v467 = vstv %s235
      %v468 = vmul.f32 %v445, %v467
      %v469 = vadd.f32 %v419, %v468
      %s470 = sadd.s32 %s254, 800
      %s471 = scalar_lea.vmem %s5, %s470
      %v472 = vld [vmem:[%s471] sm:$0xff]
      %s473 = sadd.s32 %s254, 1200
      %s474 = scalar_lea.vmem %s5, %s473
      %v475 = vld [vmem:[%s474] sm:$0xff]
      %s476 = sadd.s32 %s254, 2400
      %s477 = scalar_lea.vmem %s5, %s476
      %v478 = vld [vmem:[%s477] sm:$0xff]
      %s479 = sadd.s32 %s254, 2800
      %s480 = scalar_lea.vmem %s5, %s479
      %v481 = vld [vmem:[%s480] sm:$0xff]
      %s482 = sadd.s32 %s254, 7200
      %s483 = scalar_lea.vmem %s5, %s482
      %v484 = vld [vmem:[%s483] sm:$0xff]
      %s485 = sadd.s32 %s254, 7600
      %s486 = scalar_lea.vmem %s5, %s485
      %v487 = vld [vmem:[%s486] sm:$0xff]
      %s488 = sadd.s32 %s254, 8800
      %s489 = scalar_lea.vmem %s5, %s488
      %v490 = vld [vmem:[%s489] sm:$0xff]
      %s491 = sadd.s32 %s254, 9200
      %s492 = scalar_lea.vmem %s5, %s491
      %v493 = vld [vmem:[%s492] sm:$0xff]
      %v494 = vmul.f32 %v472, %v278
      %v495 = vmul.f32 %v475, %v280
      %v496 = vadd.f32 %v494, %v495
      %v497 = vmul.f32 %v478, %v283
      %v498 = vadd.f32 %v496, %v497
      %v499 = vmul.f32 %v481, %v286
      %v500 = vadd.f32 %v498, %v499
      %v501 = vmul.f32 %v484, %v289
      %v502 = vadd.f32 %v500, %v501
      %v503 = vmul.f32 %v487, %v292
      %v504 = vadd.f32 %v502, %v503
      %v505 = vmul.f32 %v490, %v295
      %v506 = vadd.f32 %v504, %v505
      %v507 = vmul.f32 %v493, %v298
      %v508 = vadd.f32 %v506, %v507
      %v509 = vadd.f32 %v508, %v301
      %v510 = vmax.f32 %v509, 0.0
      %v511 = vstv %s112
      %v512 = vmul.f32 %v510, %v511
      %v513 = vadd.f32 %v448, %v512
      %v514 = vstv %s128
      %v515 = vmul.f32 %v510, %v514
      %v516 = vadd.f32 %v451, %v515
      %v517 = vstv %s144
      %v518 = vmul.f32 %v510, %v517
      %v519 = vadd.f32 %v454, %v518
      %v520 = vstv %s160
      %v521 = vmul.f32 %v510, %v520
      %v522 = vadd.f32 %v457, %v521
      %v523 = vstv %s176
      %v524 = vmul.f32 %v510, %v523
      %v525 = vadd.f32 %v460, %v524
      %v526 = vstv %s192
      %v527 = vmul.f32 %v510, %v526
      %v528 = vadd.f32 %v463, %v527
      %v529 = vstv %s208
      %v530 = vmul.f32 %v510, %v529
      %v531 = vadd.f32 %v466, %v530
      %v532 = vstv %s224
      %v533 = vmul.f32 %v510, %v532
      %v534 = vadd.f32 %v469, %v533
      %v535 = vmul.f32 %v472, %v320
      %v536 = vmul.f32 %v475, %v322
      %v537 = vadd.f32 %v535, %v536
      %v538 = vmul.f32 %v478, %v325
      %v539 = vadd.f32 %v537, %v538
      %v540 = vmul.f32 %v481, %v328
      %v541 = vadd.f32 %v539, %v540
      %v542 = vmul.f32 %v484, %v331
      %v543 = vadd.f32 %v541, %v542
      %v544 = vmul.f32 %v487, %v334
      %v545 = vadd.f32 %v543, %v544
      %v546 = vmul.f32 %v490, %v337
      %v547 = vadd.f32 %v545, %v546
      %v548 = vmul.f32 %v493, %v340
      %v549 = vadd.f32 %v547, %v548
      %v550 = vadd.f32 %v549, %v343
      %v551 = vmax.f32 %v550, 0.0
      %v552 = vstv %s116
      %v553 = vmul.f32 %v551, %v552
      %v554 = vadd.f32 %v513, %v553
      %v555 = vstv %s132
      %v556 = vmul.f32 %v551, %v555
      %v557 = vadd.f32 %v516, %v556
      %v558 = vstv %s148
      %v559 = vmul.f32 %v551, %v558
      %v560 = vadd.f32 %v519, %v559
      %v561 = vstv %s164
      %v562 = vmul.f32 %v551, %v561
      %v563 = vadd.f32 %v522, %v562
      %v564 = vstv %s180
      %v565 = vmul.f32 %v551, %v564
      %v566 = vadd.f32 %v525, %v565
      %v567 = vstv %s196
      %v568 = vmul.f32 %v551, %v567
      %v569 = vadd.f32 %v528, %v568
      %v570 = vstv %s212
      %v571 = vmul.f32 %v551, %v570
      %v572 = vadd.f32 %v531, %v571
      %v573 = vstv %s228
      %v574 = vmul.f32 %v551, %v573
      %v575 = vadd.f32 %v534, %v574
      %v576 = vmul.f32 %v472, %v370
      %v577 = vmul.f32 %v475, %v372
      %v578 = vadd.f32 %v576, %v577
      %v579 = vmul.f32 %v478, %v375
      %v580 = vadd.f32 %v578, %v579
      %v581 = vmul.f32 %v481, %v378
      %v582 = vadd.f32 %v580, %v581
      %v583 = vmul.f32 %v484, %v381
      %v584 = vadd.f32 %v582, %v583
      %v585 = vmul.f32 %v487, %v384
      %v586 = vadd.f32 %v584, %v585
      %v587 = vmul.f32 %v490, %v387
      %v588 = vadd.f32 %v586, %v587
      %v589 = vmul.f32 %v493, %v390
      %v590 = vadd.f32 %v588, %v589
      %v591 = vadd.f32 %v590, %v393
      %v592 = vmax.f32 %v591, 0.0
      %v593 = vstv %s120
      %v594 = vmul.f32 %v592, %v593
      %v595 = vadd.f32 %v554, %v594
      %v596 = vstv %s136
      %v597 = vmul.f32 %v592, %v596
      %v598 = vadd.f32 %v557, %v597
      %v599 = vstv %s152
      %v600 = vmul.f32 %v592, %v599
      %v601 = vadd.f32 %v560, %v600
      %v602 = vstv %s168
      %v603 = vmul.f32 %v592, %v602
      %v604 = vadd.f32 %v563, %v603
      %v605 = vstv %s184
      %v606 = vmul.f32 %v592, %v605
      %v607 = vadd.f32 %v566, %v606
      %v608 = vstv %s200
      %v609 = vmul.f32 %v592, %v608
      %v610 = vadd.f32 %v569, %v609
      %v611 = vstv %s216
      %v612 = vmul.f32 %v592, %v611
      %v613 = vadd.f32 %v572, %v612
      %v614 = vstv %s232
      %v615 = vmul.f32 %v592, %v614
      %v616 = vadd.f32 %v575, %v615
      %v617 = vmul.f32 %v472, %v420
      %v618 = vmul.f32 %v475, %v422
      %v619 = vadd.f32 %v617, %v618
      %v620 = vmul.f32 %v478, %v425
      %v621 = vadd.f32 %v619, %v620
      %v622 = vmul.f32 %v481, %v428
      %v623 = vadd.f32 %v621, %v622
      %v624 = vmul.f32 %v484, %v431
      %v625 = vadd.f32 %v623, %v624
      %v626 = vmul.f32 %v487, %v434
      %v627 = vadd.f32 %v625, %v626
      %v628 = vmul.f32 %v490, %v437
      %v629 = vadd.f32 %v627, %v628
      %v630 = vmul.f32 %v493, %v440
      %v631 = vadd.f32 %v629, %v630
      %v632 = vadd.f32 %v631, %v443
      %v633 = vmax.f32 %v632, 0.0
      %v634 = vstv %s124
      %v635 = vmul.f32 %v633, %v634
      %v636 = vadd.f32 %v595, %v635
      %v637 = vstv %s140
      %v638 = vmul.f32 %v633, %v637
      %v639 = vadd.f32 %v598, %v638
      %v640 = vstv %s156
      %v641 = vmul.f32 %v633, %v640
      %v642 = vadd.f32 %v601, %v641
      %v643 = vstv %s172
      %v644 = vmul.f32 %v633, %v643
      %v645 = vadd.f32 %v604, %v644
      %v646 = vstv %s188
      %v647 = vmul.f32 %v633, %v646
      %v648 = vadd.f32 %v607, %v647
      %v649 = vstv %s204
      %v650 = vmul.f32 %v633, %v649
      %v651 = vadd.f32 %v610, %v650
      %v652 = vstv %s220
      %v653 = vmul.f32 %v633, %v652
      %v654 = vadd.f32 %v613, %v653
      %v655 = vstv %s236
      %v656 = vmul.f32 %v633, %v655
      %v657 = vadd.f32 %v616, %v656
      %s658 = sadd.s32 %s254, 3200
      %s659 = scalar_lea.vmem %s5, %s658
      %v660 = vld [vmem:[%s659] sm:$0xff]
      %s661 = sadd.s32 %s254, 3600
      %s662 = scalar_lea.vmem %s5, %s661
      %v663 = vld [vmem:[%s662] sm:$0xff]
      %s664 = sadd.s32 %s254, 4800
      %s665 = scalar_lea.vmem %s5, %s664
      %v666 = vld [vmem:[%s665] sm:$0xff]
      %s667 = sadd.s32 %s254, 5200
      %s668 = scalar_lea.vmem %s5, %s667
      %v669 = vld [vmem:[%s668] sm:$0xff]
      %s670 = sadd.s32 %s254, 9600
      %s671 = scalar_lea.vmem %s5, %s670
      %v672 = vld [vmem:[%s671] sm:$0xff]
      %s673 = sadd.s32 %s254, 10000
      %s674 = scalar_lea.vmem %s5, %s673
      %v675 = vld [vmem:[%s674] sm:$0xff]
      %s676 = sadd.s32 %s254, 11200
      %s677 = scalar_lea.vmem %s5, %s676
      %v678 = vld [vmem:[%s677] sm:$0xff]
      %s679 = sadd.s32 %s254, 11600
      %s680 = scalar_lea.vmem %s5, %s679
      %v681 = vld [vmem:[%s680] sm:$0xff]
      %v682 = vmul.f32 %v660, %v278
      %v683 = vmul.f32 %v663, %v280
      %v684 = vadd.f32 %v682, %v683
      %v685 = vmul.f32 %v666, %v283
      %v686 = vadd.f32 %v684, %v685
      %v687 = vmul.f32 %v669, %v286
      %v688 = vadd.f32 %v686, %v687
      %v689 = vmul.f32 %v672, %v289
      %v690 = vadd.f32 %v688, %v689
      %v691 = vmul.f32 %v675, %v292
      %v692 = vadd.f32 %v690, %v691
      %v693 = vmul.f32 %v678, %v295
      %v694 = vadd.f32 %v692, %v693
      %v695 = vmul.f32 %v681, %v298
      %v696 = vadd.f32 %v694, %v695
      %v697 = vadd.f32 %v696, %v301
      %v698 = vmax.f32 %v697, 0.0
      %v699 = vstv %s113
      %v700 = vmul.f32 %v698, %v699
      %v701 = vadd.f32 %v636, %v700
      %v702 = vstv %s129
      %v703 = vmul.f32 %v698, %v702
      %v704 = vadd.f32 %v639, %v703
      %v705 = vstv %s145
      %v706 = vmul.f32 %v698, %v705
      %v707 = vadd.f32 %v642, %v706
      %v708 = vstv %s161
      %v709 = vmul.f32 %v698, %v708
      %v710 = vadd.f32 %v645, %v709
      %v711 = vstv %s177
      %v712 = vmul.f32 %v698, %v711
      %v713 = vadd.f32 %v648, %v712
      %v714 = vstv %s193
      %v715 = vmul.f32 %v698, %v714
      %v716 = vadd.f32 %v651, %v715
      %v717 = vstv %s209
      %v718 = vmul.f32 %v698, %v717
      %v719 = vadd.f32 %v654, %v718
      %v720 = vstv %s225
      %v721 = vmul.f32 %v698, %v720
      %v722 = vadd.f32 %v657, %v721
      %v723 = vmul.f32 %v660, %v320
      %v724 = vmul.f32 %v663, %v322
      %v725 = vadd.f32 %v723, %v724
      %v726 = vmul.f32 %v666, %v325
      %v727 = vadd.f32 %v725, %v726
      %v728 = vmul.f32 %v669, %v328
      %v729 = vadd.f32 %v727, %v728
      %v730 = vmul.f32 %v672, %v331
      %v731 = vadd.f32 %v729, %v730
      %v732 = vmul.f32 %v675, %v334
      %v733 = vadd.f32 %v731, %v732
      %v734 = vmul.f32 %v678, %v337
      %v735 = vadd.f32 %v733, %v734
      %v736 = vmul.f32 %v681, %v340
      %v737 = vadd.f32 %v735, %v736
      %v738 = vadd.f32 %v737, %v343
      %v739 = vmax.f32 %v738, 0.0
      %v740 = vstv %s117
      %v741 = vmul.f32 %v739, %v740
      %v742 = vadd.f32 %v701, %v741
      %v743 = vstv %s133
      %v744 = vmul.f32 %v739, %v743
      %v745 = vadd.f32 %v704, %v744
      %v746 = vstv %s149
      %v747 = vmul.f32 %v739, %v746
      %v748 = vadd.f32 %v707, %v747
      %v749 = vstv %s165
      %v750 = vmul.f32 %v739, %v749
      %v751 = vadd.f32 %v710, %v750
      %v752 = vstv %s181
      %v753 = vmul.f32 %v739, %v752
      %v754 = vadd.f32 %v713, %v753
      %v755 = vstv %s197
      %v756 = vmul.f32 %v739, %v755
      %v757 = vadd.f32 %v716, %v756
      %v758 = vstv %s213
      %v759 = vmul.f32 %v739, %v758
      %v760 = vadd.f32 %v719, %v759
      %v761 = vstv %s229
      %v762 = vmul.f32 %v739, %v761
      %v763 = vadd.f32 %v722, %v762
      %v764 = vmul.f32 %v660, %v370
      %v765 = vmul.f32 %v663, %v372
      %v766 = vadd.f32 %v764, %v765
      %v767 = vmul.f32 %v666, %v375
      %v768 = vadd.f32 %v766, %v767
      %v769 = vmul.f32 %v669, %v378
      %v770 = vadd.f32 %v768, %v769
      %v771 = vmul.f32 %v672, %v381
      %v772 = vadd.f32 %v770, %v771
      %v773 = vmul.f32 %v675, %v384
      %v774 = vadd.f32 %v772, %v773
      %v775 = vmul.f32 %v678, %v387
      %v776 = vadd.f32 %v774, %v775
      %v777 = vmul.f32 %v681, %v390
      %v778 = vadd.f32 %v776, %v777
      %v779 = vadd.f32 %v778, %v393
      %v780 = vmax.f32 %v779, 0.0
      %v781 = vstv %s121
      %v782 = vmul.f32 %v780, %v781
      %v783 = vadd.f32 %v742, %v782
      %v784 = vstv %s137
      %v785 = vmul.f32 %v780, %v784
      %v786 = vadd.f32 %v745, %v785
      %v787 = vstv %s153
      %v788 = vmul.f32 %v780, %v787
      %v789 = vadd.f32 %v748, %v788
      %v790 = vstv %s169
      %v791 = vmul.f32 %v780, %v790
      %v792 = vadd.f32 %v751, %v791
      %v793 = vstv %s185
      %v794 = vmul.f32 %v780, %v793
      %v795 = vadd.f32 %v754, %v794
      %v796 = vstv %s201
      %v797 = vmul.f32 %v780, %v796
      %v798 = vadd.f32 %v757, %v797
      %v799 = vstv %s217
      %v800 = vmul.f32 %v780, %v799
      %v801 = vadd.f32 %v760, %v800
      %v802 = vstv %s233
      %v803 = vmul.f32 %v780, %v802
      %v804 = vadd.f32 %v763, %v803
      %v805 = vmul.f32 %v660, %v420
      %v806 = vmul.f32 %v663, %v422
      %v807 = vadd.f32 %v805, %v806
      %v808 = vmul.f32 %v666, %v425
      %v809 = vadd.f32 %v807, %v808
      %v810 = vmul.f32 %v669, %v428
      %v811 = vadd.f32 %v809, %v810
      %v812 = vmul.f32 %v672, %v431
      %v813 = vadd.f32 %v811, %v812
      %v814 = vmul.f32 %v675, %v434
      %v815 = vadd.f32 %v813, %v814
      %v816 = vmul.f32 %v678, %v437
      %v817 = vadd.f32 %v815, %v816
      %v818 = vmul.f32 %v681, %v440
      %v819 = vadd.f32 %v817, %v818
      %v820 = vadd.f32 %v819, %v443
      %v821 = vmax.f32 %v820, 0.0
      %v822 = vstv %s125
      %v823 = vmul.f32 %v821, %v822
      %v824 = vadd.f32 %v783, %v823
      %v825 = vstv %s141
      %v826 = vmul.f32 %v821, %v825
      %v827 = vadd.f32 %v786, %v826
      %v828 = vstv %s157
      %v829 = vmul.f32 %v821, %v828
      %v830 = vadd.f32 %v789, %v829
      %v831 = vstv %s173
      %v832 = vmul.f32 %v821, %v831
      %v833 = vadd.f32 %v792, %v832
      %v834 = vstv %s189
      %v835 = vmul.f32 %v821, %v834
      %v836 = vadd.f32 %v795, %v835
      %v837 = vstv %s205
      %v838 = vmul.f32 %v821, %v837
      %v839 = vadd.f32 %v798, %v838
      %v840 = vstv %s221
      %v841 = vmul.f32 %v821, %v840
      %v842 = vadd.f32 %v801, %v841
      %v843 = vstv %s237
      %v844 = vmul.f32 %v821, %v843
      %v845 = vadd.f32 %v804, %v844
      %s846 = sadd.s32 %s254, 4000
      %s847 = scalar_lea.vmem %s5, %s846
      %v848 = vld [vmem:[%s847] sm:$0xff]
      %s849 = sadd.s32 %s254, 4400
      %s850 = scalar_lea.vmem %s5, %s849
      %v851 = vld [vmem:[%s850] sm:$0xff]
      %s852 = sadd.s32 %s254, 5600
      %s853 = scalar_lea.vmem %s5, %s852
      %v854 = vld [vmem:[%s853] sm:$0xff]
      %s855 = sadd.s32 %s254, 6000
      %s856 = scalar_lea.vmem %s5, %s855
      %v857 = vld [vmem:[%s856] sm:$0xff]
      %s858 = sadd.s32 %s254, 10400
      %s859 = scalar_lea.vmem %s5, %s858
      %v860 = vld [vmem:[%s859] sm:$0xff]
      %s861 = sadd.s32 %s254, 10800
      %s862 = scalar_lea.vmem %s5, %s861
      %v863 = vld [vmem:[%s862] sm:$0xff]
      %s864 = sadd.s32 %s254, 12000
      %s865 = scalar_lea.vmem %s5, %s864
      %v866 = vld [vmem:[%s865] sm:$0xff]
      %s867 = sadd.s32 %s254, 12400
      %s868 = scalar_lea.vmem %s5, %s867
      %v869 = vld [vmem:[%s868] sm:$0xff]
      %v870 = vmul.f32 %v848, %v278
      %v871 = vmul.f32 %v851, %v280
      %v872 = vadd.f32 %v870, %v871
      %v873 = vmul.f32 %v854, %v283
      %v874 = vadd.f32 %v872, %v873
      %v875 = vmul.f32 %v857, %v286
      %v876 = vadd.f32 %v874, %v875
      %v877 = vmul.f32 %v860, %v289
      %v878 = vadd.f32 %v876, %v877
      %v879 = vmul.f32 %v863, %v292
      %v880 = vadd.f32 %v878, %v879
      %v881 = vmul.f32 %v866, %v295
      %v882 = vadd.f32 %v880, %v881
      %v883 = vmul.f32 %v869, %v298
      %v884 = vadd.f32 %v882, %v883
      %v885 = vadd.f32 %v884, %v301
      %v886 = vmax.f32 %v885, 0.0
      %v887 = vstv %s114
      %v888 = vmul.f32 %v886, %v887
      %v889 = vadd.f32 %v824, %v888
      %v890 = vstv %s130
      %v891 = vmul.f32 %v886, %v890
      %v892 = vadd.f32 %v827, %v891
      %v893 = vstv %s146
      %v894 = vmul.f32 %v886, %v893
      %v895 = vadd.f32 %v830, %v894
      %v896 = vstv %s162
      %v897 = vmul.f32 %v886, %v896
      %v898 = vadd.f32 %v833, %v897
      %v899 = vstv %s178
      %v900 = vmul.f32 %v886, %v899
      %v901 = vadd.f32 %v836, %v900
      %v902 = vstv %s194
      %v903 = vmul.f32 %v886, %v902
      %v904 = vadd.f32 %v839, %v903
      %v905 = vstv %s210
      %v906 = vmul.f32 %v886, %v905
      %v907 = vadd.f32 %v842, %v906
      %v908 = vstv %s226
      %v909 = vmul.f32 %v886, %v908
      %v910 = vadd.f32 %v845, %v909
      %v911 = vmul.f32 %v848, %v320
      %v912 = vmul.f32 %v851, %v322
      %v913 = vadd.f32 %v911, %v912
      %v914 = vmul.f32 %v854, %v325
      %v915 = vadd.f32 %v913, %v914
      %v916 = vmul.f32 %v857, %v328
      %v917 = vadd.f32 %v915, %v916
      %v918 = vmul.f32 %v860, %v331
      %v919 = vadd.f32 %v917, %v918
      %v920 = vmul.f32 %v863, %v334
      %v921 = vadd.f32 %v919, %v920
      %v922 = vmul.f32 %v866, %v337
      %v923 = vadd.f32 %v921, %v922
      %v924 = vmul.f32 %v869, %v340
      %v925 = vadd.f32 %v923, %v924
      %v926 = vadd.f32 %v925, %v343
      %v927 = vmax.f32 %v926, 0.0
      %v928 = vstv %s118
      %v929 = vmul.f32 %v927, %v928
      %v930 = vadd.f32 %v889, %v929
      %v931 = vstv %s134
      %v932 = vmul.f32 %v927, %v931
      %v933 = vadd.f32 %v892, %v932
      %v934 = vstv %s150
      %v935 = vmul.f32 %v927, %v934
      %v936 = vadd.f32 %v895, %v935
      %v937 = vstv %s166
      %v938 = vmul.f32 %v927, %v937
      %v939 = vadd.f32 %v898, %v938
      %v940 = vstv %s182
      %v941 = vmul.f32 %v927, %v940
      %v942 = vadd.f32 %v901, %v941
      %v943 = vstv %s198
      %v944 = vmul.f32 %v927, %v943
      %v945 = vadd.f32 %v904, %v944
      %v946 = vstv %s214
      %v947 = vmul.f32 %v927, %v946
      %v948 = vadd.f32 %v907, %v947
      %v949 = vstv %s230
      %v950 = vmul.f32 %v927, %v949
      %v951 = vadd.f32 %v910, %v950
      %v952 = vmul.f32 %v848, %v370
      %v953 = vmul.f32 %v851, %v372
      %v954 = vadd.f32 %v952, %v953
      %v955 = vmul.f32 %v854, %v375
      %v956 = vadd.f32 %v954, %v955
      %v957 = vmul.f32 %v857, %v378
      %v958 = vadd.f32 %v956, %v957
      %v959 = vmul.f32 %v860, %v381
      %v960 = vadd.f32 %v958, %v959
      %v961 = vmul.f32 %v863, %v384
      %v962 = vadd.f32 %v960, %v961
      %v963 = vmul.f32 %v866, %v387
      %v964 = vadd.f32 %v962, %v963
      %v965 = vmul.f32 %v869, %v390
      %v966 = vadd.f32 %v964, %v965
      %v967 = vadd.f32 %v966, %v393
      %v968 = vmax.f32 %v967, 0.0
      %v969 = vstv %s122
      %v970 = vmul.f32 %v968, %v969
      %v971 = vadd.f32 %v930, %v970
      %v972 = vstv %s138
      %v973 = vmul.f32 %v968, %v972
      %v974 = vadd.f32 %v933, %v973
      %v975 = vstv %s154
      %v976 = vmul.f32 %v968, %v975
      %v977 = vadd.f32 %v936, %v976
      %v978 = vstv %s170
      %v979 = vmul.f32 %v968, %v978
      %v980 = vadd.f32 %v939, %v979
      %v981 = vstv %s186
      %v982 = vmul.f32 %v968, %v981
      %v983 = vadd.f32 %v942, %v982
      %v984 = vstv %s202
      %v985 = vmul.f32 %v968, %v984
      %v986 = vadd.f32 %v945, %v985
      %v987 = vstv %s218
      %v988 = vmul.f32 %v968, %v987
      %v989 = vadd.f32 %v948, %v988
      %v990 = vstv %s234
      %v991 = vmul.f32 %v968, %v990
      %v992 = vadd.f32 %v951, %v991
      %v993 = vmul.f32 %v848, %v420
      %v994 = vmul.f32 %v851, %v422
      %v995 = vadd.f32 %v993, %v994
      %v996 = vmul.f32 %v854, %v425
      %v997 = vadd.f32 %v995, %v996
      %v998 = vmul.f32 %v857, %v428
      %v999 = vadd.f32 %v997, %v998
      %v1000 = vmul.f32 %v860, %v431
      %v1001 = vadd.f32 %v999, %v1000
      %v1002 = vmul.f32 %v863, %v434
      %v1003 = vadd.f32 %v1001, %v1002
      %v1004 = vmul.f32 %v866, %v437
      %v1005 = vadd.f32 %v1003, %v1004
      %v1006 = vmul.f32 %v869, %v440
      %v1007 = vadd.f32 %v1005, %v1006
      %v1008 = vadd.f32 %v1007, %v443
      %v1009 = vmax.f32 %v1008, 0.0
      %v1010 = vstv %s126
      %v1011 = vmul.f32 %v1009, %v1010
      %v1012 = vadd.f32 %v971, %v1011
      %v1013 = vstv %s142
      %v1014 = vmul.f32 %v1009, %v1013
      %v1015 = vadd.f32 %v974, %v1014
      %v1016 = vstv %s158
      %v1017 = vmul.f32 %v1009, %v1016
      %v1018 = vadd.f32 %v977, %v1017
      %v1019 = vstv %s174
      %v1020 = vmul.f32 %v1009, %v1019
      %v1021 = vadd.f32 %v980, %v1020
      %v1022 = vstv %s190
      %v1023 = vmul.f32 %v1009, %v1022
      %v1024 = vadd.f32 %v983, %v1023
      %v1025 = vstv %s206
      %v1026 = vmul.f32 %v1009, %v1025
      %v1027 = vadd.f32 %v986, %v1026
      %v1028 = vstv %s222
      %v1029 = vmul.f32 %v1009, %v1028
      %v1030 = vadd.f32 %v989, %v1029
      %v1031 = vstv %s238
      %v1032 = vmul.f32 %v1009, %v1031
      %v1033 = vadd.f32 %v992, %v1032
      %v1034 = vstv %s239
      %v1035 = vadd.f32 %v1012, %v1034
      %v1036 = vmax.f32 %v1035, 0.0
      %s1037 = scalar_lea.vmem %s6, %s254
      %v1038 = vld [vmem:[%s1037] sm:$0xff]
      %v1039 = vmul.f32 %v1036, %v1038
      %v1040 = vadd.f32 %v253, %v1039
      %v1041 = vstv %s240
      %v1042 = vadd.f32 %v1015, %v1041
      %v1043 = vmax.f32 %v1042, 0.0
      %s1044 = scalar_lea.vmem %s6, %s257
      %v1045 = vld [vmem:[%s1044] sm:$0xff]
      %v1046 = vmul.f32 %v1043, %v1045
      %v1047 = vadd.f32 %v1040, %v1046
      %v1048 = vstv %s241
      %v1049 = vadd.f32 %v1018, %v1048
      %v1050 = vmax.f32 %v1049, 0.0
      %s1051 = scalar_lea.vmem %s6, %s470
      %v1052 = vld [vmem:[%s1051] sm:$0xff]
      %v1053 = vmul.f32 %v1050, %v1052
      %v1054 = vadd.f32 %v1047, %v1053
      %v1055 = vstv %s242
      %v1056 = vadd.f32 %v1021, %v1055
      %v1057 = vmax.f32 %v1056, 0.0
      %s1058 = scalar_lea.vmem %s6, %s473
      %v1059 = vld [vmem:[%s1058] sm:$0xff]
      %v1060 = vmul.f32 %v1057, %v1059
      %v1061 = vadd.f32 %v1054, %v1060
      %v1062 = vstv %s243
      %v1063 = vadd.f32 %v1024, %v1062
      %v1064 = vmax.f32 %v1063, 0.0
      %s1065 = scalar_lea.vmem %s6, %s260
      %v1066 = vld [vmem:[%s1065] sm:$0xff]
      %v1067 = vmul.f32 %v1064, %v1066
      %v1068 = vadd.f32 %v1061, %v1067
      %v1069 = vstv %s244
      %v1070 = vadd.f32 %v1027, %v1069
      %v1071 = vmax.f32 %v1070, 0.0
      %s1072 = scalar_lea.vmem %s6, %s263
      %v1073 = vld [vmem:[%s1072] sm:$0xff]
      %v1074 = vmul.f32 %v1071, %v1073
      %v1075 = vadd.f32 %v1068, %v1074
      %v1076 = vstv %s245
      %v1077 = vadd.f32 %v1030, %v1076
      %v1078 = vmax.f32 %v1077, 0.0
      %s1079 = scalar_lea.vmem %s6, %s476
      %v1080 = vld [vmem:[%s1079] sm:$0xff]
      %v1081 = vmul.f32 %v1078, %v1080
      %v1082 = vadd.f32 %v1075, %v1081
      %v1083 = vstv %s246
      %v1084 = vadd.f32 %v1033, %v1083
      %v1085 = vmax.f32 %v1084, 0.0
      %s1086 = scalar_lea.vmem %s6, %s479
      %v1087 = vld [vmem:[%s1086] sm:$0xff]
      %v1088 = vmul.f32 %v1085, %v1087
      %v1089 = vadd.f32 %v1082, %v1088
    $region50: #{policy_forward.1} parent=1 // loop_footer
      %s252 = sadd.s32 1, %s248
    $region51: #{policy_forward.1} parent=1 // loop_footer_branch
      %247 = sbr.rel target = $region47
    $region52: #{policy_forward.1} parent=1 // loop_exit
      _
    %v1090 = vrot.slane %v253, 4
    %v1091 = vadd.f32 %v253, %v1090
    %v1092 = vrot.slane %v1091, 2
    %v1093 = vadd.f32 %v1091, %v1092
    %v1094 = vrot.slane %v1093, 1
    %v1095 = vadd.f32 %v1093, %v1094
    %s1096 = sld [smem:[#allocation2]]
    %v1097 = vstv %s1096
    %v1098 = vadd.f32 %v1095, %v1097
    %v1099 = vsub.f32 0.0, %v1098
    %v1100 = vmul.f32 %v1099, 1.442695
    %v1101 = vpow.pop %v1100
    %v1102 = vadd.f32 %v1101, 1.0
    %v1103 = vrcp.pop %v1102
    %v1104 = vmul.f32 %v1102, %v1103
    %v1105 = vsub.f32 1.0, %v1104
    %v1106 = vmul.f32 %v1103, %v1105
    %v1107 = vadd.f32 %v1103, %v1106
    %vm1108 = vweird.f32 %v1102
    %vm1109 = vweird.f32 %v1103
    %vm1110 = vmor %vm1108, %vm1109
    %v1111 = vsel %vm1110, %v1103, %v1107
    %v1112 = vand.u32 2147483647, %v1102
    %vm1113 = vcmp.eq.f32.partialorder %v1112, 8.507059e+37
    %v1114 = vand.u32 %v1102, 2147483648
    %v1115 = vor.u32 1.1754944e-38, %v1114
    %v1116 = vsel %vm1113, %v1115, %v1111
    %v1117 = vmul.f32 1.0, %v1116
    %1118 = vst [vmem:[%s7] sm:$0x1] %v1117
    // Predicated region
    $region53: #{policy_forward.1} parent=1 // pred_check
      _
    $region54: #{policy_forward.1} parent=1 // pred_check_branch
      %1120 = sbr.rel (0) target = $region56
    $region55: #{policy_forward.1} parent=1 // pred_region
      _
    $region56: #{policy_forward.1} parent=1 // pred_fallthru
      _
    // Predicated region
    $region57: #{policy_forward.1} parent=1 // pred_check
      _
    $region58: #{policy_forward.1} parent=1 // pred_check_branch
      %1122 = sbr.rel (0) target = $region60
    $region59: #{policy_forward.1} parent=1 // pred_region
      _
    $region60: #{policy_forward.1} parent=1 // pred_fallthru
      _
    %1123 = vsyncpa [#allocation4], 1
    %1124 = vsyncpa [#allocation6], 1
    %1125 = vsyncpa [#allocation9], 1

</llo_original>
